<compile_context>
chip_gen: v6e
topology: v6e:2x2x1
jax: 0.10.0
libtpu: 0.0.40
codegen_flags: <defaults>
</compile_context>

<pallas_src>
import math

import numpy as np
import jax
import jax.numpy as jnp
from jax.experimental import pallas as pl
from jax.experimental.pallas import tpu as pltpu

# ----------------------------- configuration (small shapes) -----------------------------
IN_CHANNELS = 4
LATENT_DIM = 16
HIDDEN_DIM = 16
ENCODER_DEPTH = 2
ACTOR_DEPTH = 3          # => actor has ACTOR_DEPTH - 1 = 2 hidden linear layers
PERCIEVER_DEPTH = 3
N_ACTIONS = 7
ACTOR_TEMP = 0.4
PERCIEVER_TEMP = 0.1     # unused in forward (kept for parity with the module)
IMG_HW = 16              # input spatial size
H1 = 7                   # conv1 output spatial: (16-3)//2 + 1
H2 = 3                   # conv2 output spatial: (7-3)//2 + 1
ENCODER_FINAL_HW = H2 * H2   # 9
# in_outs per the module formula (mult_per_layer = 2 for latent=16, in=4, depth=2)
IN_OUTS = [IN_CHANNELS, IN_CHANNELS * 2, LATENT_DIM]   # [4, 8, 16]
D = LATENT_DIM + HIDDEN_DIM                            # 32

# lane layout of row 0 of the (8, 128) output / state slab
L_PROBS = 0      # 7 lanes : softmax action probabilities
L_PERC = 8       # 16 lanes: perception
L_AH = 24        # 16 lanes: actor hidden state
L_PH = 40        # 16 lanes: perciever hidden state
L_IDX = 56       # 1 lane  : sampled action index (f32; exact for idx < 2**24)
L_GUMBEL = 64    # 7 lanes : Gumbel noise (input only, written by the wrapper)

_VMEM = pl.BlockSpec(memory_space=pltpu.MemorySpace.VMEM)


# ------------------------------ parameter slab row layout -------------------------------
def _layout():
    offs = {}
    r = 0

    def add(name, n):
        nonlocal r
        offs[name] = r
        r = ((r + n + 7) // 8) * 8      # keep every block 8-row (sublane) aligned

    add("ln", 1)        # (1, 128): gamma tiled in lanes 0:64, beta tiled in lanes 64:128
    add("avg", 64)      # (64, 64): block-diag channel-averaging matrix for LayerNorm
    add("sel1", 24)     # (24, 16): stride-2 row selection for conv1 (3 blocks of 8 rows)
    add("m1", 192)      # (3*64, 56): conv1 weights folded into per-kh im2col matrices
    add("b1", 1)        # (1, 56): conv1 bias tiled per output column
    add("sel2", 24)     # (24, 8): stride-2 row selection for conv2
    add("m2", 168)      # (3*56, 48): conv2 folded weights
    add("b2", 1)        # (1, 48)
    add("few", 8)       # (8, 48): final_encoder weight tiled onto the h2 layout
    add("feb", 1)       # (1, 16)
    add("aw", 64)       # 2 x (32, 32) actor weights, (in, out)
    add("ab", 2)        # 2 x (1, 32)
    add("faw", 16)      # (16, 7) final_act weight
    add("fab", 1)       # (1, 7)
    add("pw", 96)       # 3 x (32, 32) perciever weights
    add("pb", 3)        # 3 x (1, 32)
    add("eff", 7)       # (7, 16) efference embedding table
    return offs, r


_OFF, PARAM_ROWS = _layout()            # PARAM_ROWS == 720


# ----------------------------------- fused kernel ---------------------------------------
def _gelu(x):
    # torch.nn.GELU() default = exact erf-based GELU.
    return 0.5 * x * (1.0 + jax.lax.erf(x * (1.0 / math.sqrt(2.0))))


def fused_forward_kernel(p_ref, x_ref, s_ref, out_ref):
    f32 = jnp.float32
    O = _OFF

    def dot(a, b):
        return jnp.dot(a, b, preferred_element_type=f32)

    # -------- LayerNorm over C=4 on the (H, W*C) = (16, 64) layout --------------------
    x = x_ref[...]
    gamma = p_ref[O["ln"]:O["ln"] + 1, 0:64]
    beta = p_ref[O["ln"]:O["ln"] + 1, 64:128]
    avg = p_ref[O["avg"]:O["avg"] + 64, 0:64]
    mm = dot(jnp.concatenate([x, x * x], axis=0), avg)        # one MXU pass: [mean; E[x^2]]
    mean, meansq = mm[0:16, :], mm[16:32, :]
    y = (x - mean) * jax.lax.rsqrt(meansq - mean * mean + 1e-5) * gamma + beta

    # -------- conv1 4->8, k=3, s=2 (16x16 -> 7x7): row-select + folded im2col matmuls --
    y_sel = dot(p_ref[O["sel1"]:O["sel1"] + 24, 0:16], y)     # (24, 64): block kh = y[kh::2]
    acc1 = dot(y_sel[0:8, :], p_ref[O["m1"]:O["m1"] + 64, 0:56])
    acc1 = acc1 + dot(y_sel[8:16, :], p_ref[O["m1"] + 64:O["m1"] + 128, 0:56])
    acc1 = acc1 + dot(y_sel[16:24, :], p_ref[O["m1"] + 128:O["m1"] + 192, 0:56])
    h1 = _gelu(acc1 + p_ref[O["b1"]:O["b1"] + 1, 0:56])       # (8, 56); row 7 inert padding

    # -------- conv2 8->16, k=3, s=2 (7x7 -> 3x3) ---------------------------------------
    h1_sel = dot(p_ref[O["sel2"]:O["sel2"] + 24, 0:8], h1)    # (24, 56)
    acc2 = dot(h1_sel[0:8, :], p_ref[O["m2"]:O["m2"] + 56, 0:48])
    acc2 = acc2 + dot(h1_sel[8:16, :], p_ref[O["m2"] + 56:O["m2"] + 112, 0:48])
    acc2 = acc2 + dot(h1_sel[16:24, :], p_ref[O["m2"] + 112:O["m2"] + 168, 0:48])
    h2 = _gelu(acc2 + p_ref[O["b2"]:O["b2"] + 1, 0:48])       # (8, 48); rows 3..7 inert

    # -------- final_encoder: Linear(9 -> 1) as a VPU weighted reduce --------------------
    wsum = jnp.sum(h2 * p_ref[O["few"]:O["few"] + 8, 0:48], axis=0, keepdims=True)  # (1, 48)
    enc = (wsum[:, 0:16] + wsum[:, 16:32] + wsum[:, 32:48]
           + p_ref[O["feb"]:O["feb"] + 1, 0:16])              # (1, 16)

    # -------- actor ----------------------------------------------------------------------
    ah = s_ref[0:1, L_AH:L_AH + HIDDEN_DIM]
    xa = jnp.concatenate([enc, ah], axis=1)                   # (1, 32)
    for i in range(ACTOR_DEPTH - 1):
        w = p_ref[O["aw"] + D * i:O["aw"] + D * (i + 1), 0:D]
        b = p_ref[O["ab"] + i:O["ab"] + i + 1, 0:D]
        xa = _gelu(dot(xa, w) + b)
    a_lat, new_ah = xa[:, 0:LATENT_DIM], xa[:, LATENT_DIM:D]

    logits = (dot(a_lat, p_ref[O["faw"]:O["faw"] + LATENT_DIM, 0:N_ACTIONS])
              + p_ref[O["fab"]:O["fab"] + 1, 0:N_ACTIONS])
    scaled = logits * (1.0 / ACTOR_TEMP)                      # (1, 7)
    e = jnp.exp(scaled - jnp.max(scaled, axis=-1, keepdims=True))
    probs = e / jnp.sum(e, axis=-1, keepdims=True)            # exact softmax(logits / temp)

    # -------- categorical sample: Gumbel-max over scaled logits (host-supplied noise) ----
    gum = s_ref[0:1, L_GUMBEL:L_GUMBEL + N_ACTIONS]
    score = scaled + gum
    lane_f = jax.lax.broadcasted_iota(jnp.int32, (1, N_ACTIONS), 1).astype(f32)
    cand = jnp.where(score >= jnp.max(score, axis=-1, keepdims=True), lane_f, f32(1e9))
    a_idx = jnp.min(cand, axis=-1, keepdims=True)             # (1, 1) f32 action index
    onehot = (lane_f == a_idx).astype(f32)                    # (1, 7)

    # -------- perceive --------------------------------------------------------------------
    eff = dot(onehot, p_ref[O["eff"]:O["eff"] + N_ACTIONS, 0:LATENT_DIM])   # embedding lookup
    ph = s_ref[0:1, L_PH:L_PH + HIDDEN_DIM]
    xp = jnp.concatenate([enc + eff, ph], axis=1)             # (1, 32)
    for i in range(PERCIEVER_DEPTH):
        w = p_ref[O["pw"] + D * i:O["pw"] + D * (i + 1), 0:D]
        b = p_ref[O["pb"] + i:O["pb"] + i + 1, 0:D]
        xp = _gelu(dot(xp, w) + b)
    perception, new_ph = xp[:, 0:LATENT_DIM], xp[:, LATENT_DIM:D]

    # -------- single lane-dense (8, 128) full-tile store; row 0 carries everything -------
    row0 = jnp.concatenate([
        probs,                                  # lanes  0:7
        jnp.zeros((1, 1), f32),                 #        7:8
        perception,                             #        8:24
        new_ah,                                 #       24:40
        new_ph,                                 #       40:56
        a_idx,                                  #       56:57
        jnp.zeros((1, 128 - 57), f32),          #       57:128
    ], axis=1)
    out_ref[...] = jnp.concatenate([row0, jnp.zeros((7, 128), f32)], axis=0)


# -------------------------------- parameter slab (built once) ----------------------------
def init_param_slab(key):
    """PyTorch-default initialisation, packed into ONE (PARAM_ROWS, 128) f32 VMEM slab.

    Conv weights are pre-folded into per-kh im2col block matrices, stride-2 row-selection
    matrices are 0/1 constants, linear weights are stored (in, out); everything is placed
    at 8-row-aligned offsets so the kernel slices are layout-friendly.
    """
    def uni(k, shape, bound):
        return jax.random.uniform(k, shape, jnp.float32, -bound, bound)

    keys = iter(jax.random.split(key, 24))
    O = _OFF
    slab = jnp.zeros((PARAM_ROWS, 128), jnp.float32)

    def put(s, row, block):
        block = jnp.asarray(block, jnp.float32)
        return s.at[row:row + block.shape[0], 0:block.shape[1]].set(block)

    # LayerNorm(4): gamma=1 / beta=0 tiled per pixel, packed into one 128-lane row.
    ln_row = np.concatenate([np.ones(IMG_HW * IN_CHANNELS, np.float32),
                             np.zeros(IMG_HW * IN_CHANNELS, np.float32)]).reshape(1, 128)
    slab = put(slab, O["ln"], ln_row)

    # Block-diagonal channel-averaging matrix for LN mean / E[x^2].
    idx = np.arange(IMG_HW * IN_CHANNELS)
    avg = (idx[:, None] // IN_CHANNELS == idx[None, :] // IN_CHANNELS).astype(np.float32)
    slab = put(slab, O["avg"], avg / IN_CHANNELS)

    # Stride-2 row-selection matrices (3 blocks of 8 rows each; pad rows stay zero).
    sel1 = np.zeros((24, IMG_HW), np.float32)
    for kh in range(3):
        for oh in range(H1):
            sel1[8 * kh + oh, 2 * oh + kh] = 1.0
    slab = put(slab, O["sel1"], sel1)
    sel2 = np.zeros((24, 8), np.float32)
    for kh in range(3):
        for oh in range(H2):
            sel2[8 * kh + oh, 2 * oh + kh] = 1.0
    slab = put(slab, O["sel2"], sel2)

    # conv1 (4 -> 8, k=3, s=2): fold into 3 per-kh (64, 56) matrices.
    cin, cout = IN_OUTS[0], IN_OUTS[1]
    bnd = 1.0 / math.sqrt(cin * 9)
    w1 = np.asarray(uni(next(keys), (cout, cin, 3, 3), bnd))
    b1 = np.asarray(uni(next(keys), (cout,), bnd))
    m1 = np.zeros((3, IMG_HW * cin, H1 * cout), np.float32)
    for kh in range(3):
        for ow in range(H1):
            for kw in range(3):
                w = 2 * ow + kw
                m1[kh, cin * w:cin * (w + 1), cout * ow:cout * (ow + 1)] = w1[:, :, kh, kw].T
    slab = put(slab, O["m1"], m1.reshape(3 * IMG_HW * cin, H1 * cout))
    slab = put(slab, O["b1"], np.tile(b1, H1).reshape(1, H1 * cout))

    # conv2 (8 -> 16, k=3, s=2): fold into 3 per-kh (56, 48) matrices.
    cin, cout = IN_OUTS[1], IN_OUTS[2]
    bnd = 1.0 / math.sqrt(cin * 9)
    w2 = np.asarray(uni(next(keys), (cout, cin, 3, 3), bnd))
    b2 = np.asarray(uni(next(keys), (cout,), bnd))
    m2 = np.zeros((3, H1 * cin, H2 * cout), np.float32)
    for kh in range(3):
        for ow in range(H2):
            for kw in range(3):
                w = 2 * ow + kw
                m2[kh, cin * w:cin * (w + 1), cout * ow:cout * (ow + 1)] = w2[:, :, kh, kw].T
    slab = put(slab, O["m2"], m2.reshape(3 * H1 * cin, H2 * cout))
    slab = put(slab, O["b2"], np.tile(b2, H2).reshape(1, H2 * cout))

    # final_encoder: Linear(9, 1); weight tiled onto the (8, 48) h2 layout, rows 3..7 zero.
    bnd = 1.0 / math.sqrt(ENCODER_FINAL_HW)
    few = np.asarray(uni(next(keys), (1, ENCODER_FINAL_HW), bnd))[0]
    feb = np.asarray(uni(next(keys), (1,), bnd))
    few_t = np.zeros((8, H2 * LATENT_DIM), np.float32)
    for oh in range(H2):
        few_t[oh] = np.repeat(few[H2 * oh:H2 * (oh + 1)], LATENT_DIM)
    slab = put(slab, O["few"], few_t)
    slab = put(slab, O["feb"], np.tile(feb, LATENT_DIM).reshape(1, LATENT_DIM))

    # actor: 2 x Linear(32, 32), stored (in, out).
    bnd = 1.0 / math.sqrt(D)
    for i in range(ACTOR_DEPTH - 1):
        w = uni(next(keys), (D, D), bnd)
        b = uni(next(keys), (D,), bnd)
        slab = put(slab, O["aw"] + D * i, jnp.transpose(w))
        slab = put(slab, O["ab"] + i, b.reshape(1, D))

    # final_act: Linear(16, 7).
    bnd = 1.0 / math.sqrt(LATENT_DIM)
    slab = put(slab, O["faw"], jnp.transpose(uni(next(keys), (N_ACTIONS, LATENT_DIM), bnd)))
    slab = put(slab, O["fab"], uni(next(keys), (N_ACTIONS,), bnd).reshape(1, N_ACTIONS))

    # perciever: 3 x Linear(32, 32).
    bnd = 1.0 / math.sqrt(D)
    for i in range(PERCIEVER_DEPTH):
        w = uni(next(keys), (D, D), bnd)
        b = uni(next(keys), (D,), bnd)
        slab = put(slab, O["pw"] + D * i, jnp.transpose(w))
        slab = put(slab, O["pb"] + i, b.reshape(1, D))

    # efference embedding table (torch.nn.Embedding default: N(0, 1)).
    slab = put(slab, O["eff"], jax.random.normal(next(keys), (N_ACTIONS, LATENT_DIM), jnp.float32))
    return slab


# ------------------------------------- forward --------------------------------------------
def forward(param_slab, state_slab, x, gumbel):
    """One agent step.  state_slab is the previous step's output slab (or zeros at reset);
    the returned slab is the next step's state_slab."""
    x2d = x.reshape(IMG_HW, IMG_HW * IN_CHANNELS).astype(jnp.float32)   # (16, 64) free view
    st = state_slab.at[0:1, L_GUMBEL:L_GUMBEL + N_ACTIONS].set(
        gumbel.astype(jnp.float32).reshape(1, N_ACTIONS))

    slab = pl.pallas_call(
        fused_forward_kernel,
        out_shape=jax.ShapeDtypeStruct((8, 128), jnp.float32),
        in_specs=[_VMEM, _VMEM, _VMEM],
        out_specs=_VMEM,
    )(param_slab, x2d, st)

    action = slab[0:1, L_PROBS:L_PROBS + N_ACTIONS]
    perception = slab[0:1, L_PERC:L_PERC + LATENT_DIM]
    action_val = slab[0, L_IDX].astype(jnp.int32)   # exact f32 round-trip for 0..6
    return action, perception, action_val, slab


# ---------------------------------------- main ---------------------------------------------
if __name__ == "__main__":
    key = jax.random.PRNGKey(0)
    k_x1, k_x2, k_p, k_g1, k_g2 = jax.random.split(key, 5)

    param_slab = init_param_slab(k_p)
    state = jnp.zeros((8, 128), jnp.float32)   # zero hidden states, like the torch buffers

    fwd = jax.jit(forward)

    # step 1
    x1 = jax.random.uniform(k_x1, (1, IMG_HW, IMG_HW, IN_CHANNELS), jnp.float32)
    g1 = jax.random.gumbel(k_g1, (1, N_ACTIONS), jnp.float32)
    action, perception, action_val, state = fwd(param_slab, state, x1, g1)

    # step 2 (chained hidden state: output slab feeds straight back in)
    x2 = jax.random.uniform(k_x2, (1, IMG_HW, IMG_HW, IN_CHANNELS), jnp.float32)
    g2 = jax.random.gumbel(k_g2, (1, N_ACTIONS), jnp.float32)
    action, perception, action_val, state = fwd(param_slab, state, x2, g2)

    jax.block_until_ready((action, perception, action_val, state))

    assert action.shape == (1, N_ACTIONS)
    assert perception.shape == (1, LATENT_DIM)
    assert action_val.shape == ()
    assert bool(jnp.all(jnp.isfinite(action)))
    assert bool(jnp.all(jnp.isfinite(perception)))
    assert abs(float(jnp.sum(action)) - 1.0) < 1e-3
    assert 0 <= int(action_val) < N_ACTIONS
    print("KERNEL_OK")
</pallas_src>

<mosaic_0001>
module attributes {stable_mosaic.version = 11 : i64} {
  func.func @fused_forward_kernel(%arg0: memref<720x128xf32, #tpu.memory_space<vmem>>, %arg1: memref<16x64xf32, #tpu.memory_space<vmem>>, %arg2: memref<8x128xf32, #tpu.memory_space<vmem>>, %arg3: memref<8x128xf32, #tpu.memory_space<vmem>>) attributes {dimension_semantics = [], scalar_prefetch = 0 : i64, scratch_operands = 0 : i64, tpu.core_type = #tpu.core_type<tc>} {
    %c0 = arith.constant 0 : index
    %c0_0 = arith.constant 0 : index
    %0 = vector.load %arg1[%c0, %c0_0] : memref<16x64xf32, #tpu.memory_space<vmem>>, vector<16x64xf32>
    %c0_1 = arith.constant 0 : index
    %c0_2 = arith.constant 0 : index
    %1 = vector.load %arg0[%c0_1, %c0_2] : memref<720x128xf32, #tpu.memory_space<vmem>>, vector<1x64xf32>
    %c0_3 = arith.constant 0 : index
    %c64 = arith.constant 64 : index
    %2 = vector.load %arg0[%c0_3, %c64] : memref<720x128xf32, #tpu.memory_space<vmem>>, vector<1x64xf32>
    %c8 = arith.constant 8 : index
    %c0_4 = arith.constant 0 : index
    %3 = vector.load %arg0[%c8, %c0_4] : memref<720x128xf32, #tpu.memory_space<vmem>>, vector<64x64xf32>
    %4 = arith.mulf %0, %0 : vector<16x64xf32>
    %5 = tpu.concatenate %0, %4 in 0 : vector<16x64xf32>, vector<16x64xf32> -> vector<32x64xf32>
    %cst = arith.constant dense<0.000000e+00> : vector<32x64xf32>
    %6 = tpu.matmul %5, %3, %cst {dimension_numbers = #tpu.dot_dimension_numbers<[1], [0], [0], [1], [0, 0, 1, 1], [], []>} : vector<32x64xf32>, vector<64x64xf32>, vector<32x64xf32> -> vector<32x64xf32>
    %7 = vector.extract_strided_slice %6 {offsets = [0, 0], sizes = [16, 64], strides = [1, 1]} : vector<32x64xf32> to vector<16x64xf32>
    %8 = vector.extract_strided_slice %6 {offsets = [16, 0], sizes = [16, 64], strides = [1, 1]} : vector<32x64xf32> to vector<16x64xf32>
    %9 = arith.subf %0, %7 : vector<16x64xf32>
    %10 = arith.mulf %7, %7 : vector<16x64xf32>
    %11 = arith.subf %8, %10 : vector<16x64xf32>
    %cst_5 = arith.constant 9.99999974E-6 : f32
    %12 = vector.broadcast %cst_5 : f32 to vector<16x64xf32>
    %13 = arith.addf %11, %12 : vector<16x64xf32>
    %14 = math.rsqrt %13 : vector<16x64xf32>
    %15 = arith.mulf %9, %14 : vector<16x64xf32>
    %16 = vector.broadcast %1 : vector<1x64xf32> to vector<16x64xf32>
    %17 = arith.mulf %15, %16 : vector<16x64xf32>
    %18 = vector.broadcast %2 : vector<1x64xf32> to vector<16x64xf32>
    %19 = arith.addf %17, %18 : vector<16x64xf32>
    %c72 = arith.constant 72 : index
    %c0_6 = arith.constant 0 : index
    %20 = vector.load %arg0[%c72, %c0_6] : memref<720x128xf32, #tpu.memory_space<vmem>>, vector<24x16xf32>
    %cst_7 = arith.constant dense<0.000000e+00> : vector<24x64xf32>
    %21 = tpu.matmul %20, %19, %cst_7 {dimension_numbers = #tpu.dot_dimension_numbers<[1], [0], [0], [1], [0, 0, 1, 1], [], []>} : vector<24x16xf32>, vector<16x64xf32>, vector<24x64xf32> -> vector<24x64xf32>
    %22 = vector.extract_strided_slice %21 {offsets = [0, 0], sizes = [8, 64], strides = [1, 1]} : vector<24x64xf32> to vector<8x64xf32>
    %c96 = arith.constant 96 : index
    %c0_8 = arith.constant 0 : index
    %23 = vector.load %arg0[%c96, %c0_8] : memref<720x128xf32, #tpu.memory_space<vmem>>, vector<64x56xf32>
    %cst_9 = arith.constant dense<0.000000e+00> : vector<8x56xf32>
    %24 = tpu.matmul %22, %23, %cst_9 {dimension_numbers = #tpu.dot_dimension_numbers<[1], [0], [0], [1], [0, 0, 1, 1], [], []>} : vector<8x64xf32>, vector<64x56xf32>, vector<8x56xf32> -> vector<8x56xf32>
    %25 = vector.extract_strided_slice %21 {offsets = [8, 0], sizes = [8, 64], strides = [1, 1]} : vector<24x64xf32> to vector<8x64xf32>
    %c160 = arith.constant 160 : index
    %c0_10 = arith.constant 0 : index
    %26 = vector.load %arg0[%c160, %c0_10] : memref<720x128xf32, #tpu.memory_space<vmem>>, vector<64x56xf32>
    %cst_11 = arith.constant dense<0.000000e+00> : vector<8x56xf32>
    %27 = tpu.matmul %25, %26, %cst_11 {dimension_numbers = #tpu.dot_dimension_numbers<[1], [0], [0], [1], [0, 0, 1, 1], [], []>} : vector<8x64xf32>, vector<64x56xf32>, vector<8x56xf32> -> vector<8x56xf32>
    %28 = arith.addf %24, %27 : vector<8x56xf32>
    %29 = vector.extract_strided_slice %21 {offsets = [16, 0], sizes = [8, 64], strides = [1, 1]} : vector<24x64xf32> to vector<8x64xf32>
    %c224 = arith.constant 224 : index
    %c0_12 = arith.constant 0 : index
    %30 = vector.load %arg0[%c224, %c0_12] : memref<720x128xf32, #tpu.memory_space<vmem>>, vector<64x56xf32>
    %cst_13 = arith.constant dense<0.000000e+00> : vector<8x56xf32>
    %31 = tpu.matmul %29, %30, %cst_13 {dimension_numbers = #tpu.dot_dimension_numbers<[1], [0], [0], [1], [0, 0, 1, 1], [], []>} : vector<8x64xf32>, vector<64x56xf32>, vector<8x56xf32> -> vector<8x56xf32>
    %32 = arith.addf %28, %31 : vector<8x56xf32>
    %c288 = arith.constant 288 : index
    %c0_14 = arith.constant 0 : index
    %33 = vector.load %arg0[%c288, %c0_14] : memref<720x128xf32, #tpu.memory_space<vmem>>, vector<1x56xf32>
    %34 = vector.broadcast %33 : vector<1x56xf32> to vector<8x56xf32>
    %35 = arith.addf %32, %34 : vector<8x56xf32>
    %cst_15 = arith.constant 5.000000e-01 : f32
    %36 = vector.broadcast %cst_15 : f32 to vector<8x56xf32>
    %37 = arith.mulf %36, %35 : vector<8x56xf32>
    %cst_16 = arith.constant 0.707106769 : f32
    %38 = vector.broadcast %cst_16 : f32 to vector<8x56xf32>
    %39 = arith.mulf %35, %38 : vector<8x56xf32>
    %40 = math.erf %39 : vector<8x56xf32>
    %cst_17 = arith.constant 1.000000e+00 : f32
    %41 = vector.broadcast %cst_17 : f32 to vector<8x56xf32>
    %42 = arith.addf %41, %40 : vector<8x56xf32>
    %43 = arith.mulf %37, %42 : vector<8x56xf32>
    %c296 = arith.constant 296 : index
    %c0_18 = arith.constant 0 : index
    %44 = vector.load %arg0[%c296, %c0_18] : memref<720x128xf32, #tpu.memory_space<vmem>>, vector<24x8xf32>
    %cst_19 = arith.constant dense<0.000000e+00> : vector<24x56xf32>
    %45 = tpu.matmul %44, %43, %cst_19 {dimension_numbers = #tpu.dot_dimension_numbers<[1], [0], [0], [1], [0, 0, 1, 1], [], []>} : vector<24x8xf32>, vector<8x56xf32>, vector<24x56xf32> -> vector<24x56xf32>
    %46 = vector.extract_strided_slice %45 {offsets = [0, 0], sizes = [8, 56], strides = [1, 1]} : vector<24x56xf32> to vector<8x56xf32>
    %c320 = arith.constant 320 : index
    %c0_20 = arith.constant 0 : index
    %47 = vector.load %arg0[%c320, %c0_20] : memref<720x128xf32, #tpu.memory_space<vmem>>, vector<56x48xf32>
    %cst_21 = arith.constant dense<0.000000e+00> : vector<8x48xf32>
    %48 = tpu.matmul %46, %47, %cst_21 {dimension_numbers = #tpu.dot_dimension_numbers<[1], [0], [0], [1], [0, 0, 1, 1], [], []>} : vector<8x56xf32>, vector<56x48xf32>, vector<8x48xf32> -> vector<8x48xf32>
    %49 = vector.extract_strided_slice %45 {offsets = [8, 0], sizes = [8, 56], strides = [1, 1]} : vector<24x56xf32> to vector<8x56xf32>
    %c376 = arith.constant 376 : index
    %c0_22 = arith.constant 0 : index
    %50 = vector.load %arg0[%c376, %c0_22] : memref<720x128xf32, #tpu.memory_space<vmem>>, vector<56x48xf32>
    %cst_23 = arith.constant dense<0.000000e+00> : vector<8x48xf32>
    %51 = tpu.matmul %49, %50, %cst_23 {dimension_numbers = #tpu.dot_dimension_numbers<[1], [0], [0], [1], [0, 0, 1, 1], [], []>} : vector<8x56xf32>, vector<56x48xf32>, vector<8x48xf32> -> vector<8x48xf32>
    %52 = arith.addf %48, %51 : vector<8x48xf32>
    %53 = vector.extract_strided_slice %45 {offsets = [16, 0], sizes = [8, 56], strides = [1, 1]} : vector<24x56xf32> to vector<8x56xf32>
    %c432 = arith.constant 432 : index
    %c0_24 = arith.constant 0 : index
    %54 = vector.load %arg0[%c432, %c0_24] : memref<720x128xf32, #tpu.memory_space<vmem>>, vector<56x48xf32>
    %cst_25 = arith.constant dense<0.000000e+00> : vector<8x48xf32>
    %55 = tpu.matmul %53, %54, %cst_25 {dimension_numbers = #tpu.dot_dimension_numbers<[1], [0], [0], [1], [0, 0, 1, 1], [], []>} : vector<8x56xf32>, vector<56x48xf32>, vector<8x48xf32> -> vector<8x48xf32>
    %56 = arith.addf %52, %55 : vector<8x48xf32>
    %c488 = arith.constant 488 : index
    %c0_26 = arith.constant 0 : index
    %57 = vector.load %arg0[%c488, %c0_26] : memref<720x128xf32, #tpu.memory_space<vmem>>, vector<1x48xf32>
    %58 = vector.broadcast %57 : vector<1x48xf32> to vector<8x48xf32>
    %59 = arith.addf %56, %58 : vector<8x48xf32>
    %cst_27 = arith.constant 5.000000e-01 : f32
    %60 = vector.broadcast %cst_27 : f32 to vector<8x48xf32>
    %61 = arith.mulf %60, %59 : vector<8x48xf32>
    %cst_28 = arith.constant 0.707106769 : f32
    %62 = vector.broadcast %cst_28 : f32 to vector<8x48xf32>
    %63 = arith.mulf %59, %62 : vector<8x48xf32>
    %64 = math.erf %63 : vector<8x48xf32>
    %cst_29 = arith.constant 1.000000e+00 : f32
    %65 = vector.broadcast %cst_29 : f32 to vector<8x48xf32>
    %66 = arith.addf %65, %64 : vector<8x48xf32>
    %67 = arith.mulf %61, %66 : vector<8x48xf32>
    %c496 = arith.constant 496 : index
    %c0_30 = arith.constant 0 : index
    %68 = vector.load %arg0[%c496, %c0_30] : memref<720x128xf32, #tpu.memory_space<vmem>>, vector<8x48xf32>
    %69 = arith.mulf %67, %68 : vector<8x48xf32>
    %cst_31 = arith.constant dense<0.000000e+00> : vector<48xf32>
    %70 = vector.multi_reduction <add>, %69, %cst_31 [0] : vector<8x48xf32> to vector<48xf32>
    %71 = vector.shape_cast %70 : vector<48xf32> to vector<1x48xf32>
    %72 = vector.extract_strided_slice %71 {offsets = [0, 0], sizes = [1, 16], strides = [1, 1]} : vector<1x48xf32> to vector<1x16xf32>
    %73 = vector.extract_strided_slice %71 {offsets = [0, 16], sizes = [1, 16], strides = [1, 1]} : vector<1x48xf32> to vector<1x16xf32>
    %74 = arith.addf %72, %73 : vector<1x16xf32>
    %75 = vector.extract_strided_slice %71 {offsets = [0, 32], sizes = [1, 16], strides = [1, 1]} : vector<1x48xf32> to vector<1x16xf32>
    %76 = arith.addf %74, %75 : vector<1x16xf32>
    %c504 = arith.constant 504 : index
    %c0_32 = arith.constant 0 : index
    %77 = vector.load %arg0[%c504, %c0_32] : memref<720x128xf32, #tpu.memory_space<vmem>>, vector<1x16xf32>
    %78 = arith.addf %76, %77 : vector<1x16xf32>
    %c0_33 = arith.constant 0 : index
    %c24 = arith.constant 24 : index
    %79 = vector.load %arg2[%c0_33, %c24] : memref<8x128xf32, #tpu.memory_space<vmem>>, vector<1x16xf32>
    %80 = tpu.concatenate %78, %79 in 1 : vector<1x16xf32>, vector<1x16xf32> -> vector<1x32xf32>
    %c512 = arith.constant 512 : index
    %c0_34 = arith.constant 0 : index
    %81 = vector.load %arg0[%c512, %c0_34] : memref<720x128xf32, #tpu.memory_space<vmem>>, vector<32x32xf32>
    %c576 = arith.constant 576 : index
    %c0_35 = arith.constant 0 : index
    %82 = vector.load %arg0[%c576, %c0_35] : memref<720x128xf32, #tpu.memory_space<vmem>>, vector<1x32xf32>
    %cst_36 = arith.constant dense<0.000000e+00> : vector<1x32xf32>
    %83 = tpu.matmul %80, %81, %cst_36 {dimension_numbers = #tpu.dot_dimension_numbers<[1], [0], [0], [1], [0, 0, 1, 1], [], []>} : vector<1x32xf32>, vector<32x32xf32>, vector<1x32xf32> -> vector<1x32xf32>
    %84 = arith.addf %83, %82 : vector<1x32xf32>
    %cst_37 = arith.constant 5.000000e-01 : f32
    %85 = vector.broadcast %cst_37 : f32 to vector<1x32xf32>
    %86 = arith.mulf %85, %84 : vector<1x32xf32>
    %cst_38 = arith.constant 0.707106769 : f32
    %87 = vector.broadcast %cst_38 : f32 to vector<1x32xf32>
    %88 = arith.mulf %84, %87 : vector<1x32xf32>
    %89 = math.erf %88 : vector<1x32xf32>
    %cst_39 = arith.constant 1.000000e+00 : f32
    %90 = vector.broadcast %cst_39 : f32 to vector<1x32xf32>
    %91 = arith.addf %90, %89 : vector<1x32xf32>
    %92 = arith.mulf %86, %91 : vector<1x32xf32>
    %c544 = arith.constant 544 : index
    %c0_40 = arith.constant 0 : index
    %93 = vector.load %arg0[%c544, %c0_40] : memref<720x128xf32, #tpu.memory_space<vmem>>, vector<32x32xf32>
    %c577 = arith.constant 577 : index
    %c0_41 = arith.constant 0 : index
    %94 = vector.load %arg0[%c577, %c0_41] : memref<720x128xf32, #tpu.memory_space<vmem>>, vector<1x32xf32>
    %cst_42 = arith.constant dense<0.000000e+00> : vector<1x32xf32>
    %95 = tpu.matmul %92, %93, %cst_42 {dimension_numbers = #tpu.dot_dimension_numbers<[1], [0], [0], [1], [0, 0, 1, 1], [], []>} : vector<1x32xf32>, vector<32x32xf32>, vector<1x32xf32> -> vector<1x32xf32>
    %96 = arith.addf %95, %94 : vector<1x32xf32>
    %cst_43 = arith.constant 5.000000e-01 : f32
    %97 = vector.broadcast %cst_43 : f32 to vector<1x32xf32>
    %98 = arith.mulf %97, %96 : vector<1x32xf32>
    %cst_44 = arith.constant 0.707106769 : f32
    %99 = vector.broadcast %cst_44 : f32 to vector<1x32xf32>
    %100 = arith.mulf %96, %99 : vector<1x32xf32>
    %101 = math.erf %100 : vector<1x32xf32>
    %cst_45 = arith.constant 1.000000e+00 : f32
    %102 = vector.broadcast %cst_45 : f32 to vector<1x32xf32>
    %103 = arith.addf %102, %101 : vector<1x32xf32>
    %104 = arith.mulf %98, %103 : vector<1x32xf32>
    %105 = vector.extract_strided_slice %104 {offsets = [0, 0], sizes = [1, 16], strides = [1, 1]} : vector<1x32xf32> to vector<1x16xf32>
    %106 = vector.extract_strided_slice %104 {offsets = [0, 16], sizes = [1, 16], strides = [1, 1]} : vector<1x32xf32> to vector<1x16xf32>
    %c584 = arith.constant 584 : index
    %c0_46 = arith.constant 0 : index
    %107 = vector.load %arg0[%c584, %c0_46] : memref<720x128xf32, #tpu.memory_space<vmem>>, vector<16x7xf32>
    %cst_47 = arith.constant dense<0.000000e+00> : vector<1x7xf32>
    %108 = tpu.matmul %105, %107, %cst_47 {dimension_numbers = #tpu.dot_dimension_numbers<[1], [0], [0], [1], [0, 0, 1, 1], [], []>} : vector<1x16xf32>, vector<16x7xf32>, vector<1x7xf32> -> vector<1x7xf32>
    %c600 = arith.constant 600 : index
    %c0_48 = arith.constant 0 : index
    %109 = vector.load %arg0[%c600, %c0_48] : memref<720x128xf32, #tpu.memory_space<vmem>>, vector<1x7xf32>
    %110 = arith.addf %108, %109 : vector<1x7xf32>
    %cst_49 = arith.constant 2.500000e+00 : f32
    %111 = vector.broadcast %cst_49 : f32 to vector<1x7xf32>
    %112 = arith.mulf %110, %111 : vector<1x7xf32>
    %cst_50 = arith.constant dense<0xFF800000> : vector<1xf32>
    %113 = vector.multi_reduction <maximumf>, %112, %cst_50 [1] : vector<1x7xf32> to vector<1xf32>
    %114 = vector.shape_cast %113 : vector<1xf32> to vector<1x1xf32>
    %115 = vector.broadcast %114 : vector<1x1xf32> to vector<1x7xf32>
    %116 = arith.subf %112, %115 : vector<1x7xf32>
    %117 = math.exp %116 : vector<1x7xf32>
    %cst_51 = arith.constant dense<0.000000e+00> : vector<1xf32>
    %118 = vector.multi_reduction <add>, %117, %cst_51 [1] : vector<1x7xf32> to vector<1xf32>
    %119 = vector.shape_cast %118 : vector<1xf32> to vector<1x1xf32>
    %120 = vector.broadcast %119 : vector<1x1xf32> to vector<1x7xf32>
    %121 = arith.divf %117, %120 : vector<1x7xf32>
    %c0_52 = arith.constant 0 : index
    %c64_53 = arith.constant 64 : index
    %122 = vector.load %arg2[%c0_52, %c64_53] : memref<8x128xf32, #tpu.memory_space<vmem>>, vector<1x7xf32>
    %123 = arith.addf %112, %122 : vector<1x7xf32>
    %124 = tpu.iota {dimensions = array<i32: 1>} : vector<1x7xi32>
    %125 = arith.sitofp %124 : vector<1x7xi32> to vector<1x7xf32>
    %cst_54 = arith.constant dense<0xFF800000> : vector<1xf32>
    %126 = vector.multi_reduction <maximumf>, %123, %cst_54 [1] : vector<1x7xf32> to vector<1xf32>
    %127 = vector.shape_cast %126 : vector<1xf32> to vector<1x1xf32>
    %128 = vector.broadcast %127 : vector<1x1xf32> to vector<1x7xf32>
    %129 = arith.cmpf oge, %123, %128 : vector<1x7xf32>
    %cst_55 = arith.constant 1.000000e+09 : f32
    %130 = vector.broadcast %cst_55 : f32 to vector<1x7xf32>
    %131 = arith.select %129, %125, %130 : vector<1x7xi1>, vector<1x7xf32>
    %cst_56 = arith.constant dense<0x7F800000> : vector<1xf32>
    %132 = vector.multi_reduction <minimumf>, %131, %cst_56 [1] : vector<1x7xf32> to vector<1xf32>
    %133 = vector.shape_cast %132 : vector<1xf32> to vector<1x1xf32>
    %134 = vector.broadcast %133 : vector<1x1xf32> to vector<1x7xf32>
    %135 = arith.cmpf oeq, %125, %134 : vector<1x7xf32>
    %136 = arith.extui %135 : vector<1x7xi1> to vector<1x7xi32>
    %137 = arith.sitofp %136 : vector<1x7xi32> to vector<1x7xf32>
    %c712 = arith.constant 712 : index
    %c0_57 = arith.constant 0 : index
    %138 = vector.load %arg0[%c712, %c0_57] : memref<720x128xf32, #tpu.memory_space<vmem>>, vector<7x16xf32>
    %cst_58 = arith.constant dense<0.000000e+00> : vector<1x16xf32>
    %139 = tpu.matmul %137, %138, %cst_58 {dimension_numbers = #tpu.dot_dimension_numbers<[1], [0], [0], [1], [0, 0, 1, 1], [], []>} : vector<1x7xf32>, vector<7x16xf32>, vector<1x16xf32> -> vector<1x16xf32>
    %c0_59 = arith.constant 0 : index
    %c40 = arith.constant 40 : index
    %140 = vector.load %arg2[%c0_59, %c40] : memref<8x128xf32, #tpu.memory_space<vmem>>, vector<1x16xf32>
    %141 = arith.addf %78, %139 : vector<1x16xf32>
    %142 = tpu.concatenate %141, %140 in 1 : vector<1x16xf32>, vector<1x16xf32> -> vector<1x32xf32>
    %c608 = arith.constant 608 : index
    %c0_60 = arith.constant 0 : index
    %143 = vector.load %arg0[%c608, %c0_60] : memref<720x128xf32, #tpu.memory_space<vmem>>, vector<32x32xf32>
    %c704 = arith.constant 704 : index
    %c0_61 = arith.constant 0 : index
    %144 = vector.load %arg0[%c704, %c0_61] : memref<720x128xf32, #tpu.memory_space<vmem>>, vector<1x32xf32>
    %cst_62 = arith.constant dense<0.000000e+00> : vector<1x32xf32>
    %145 = tpu.matmul %142, %143, %cst_62 {dimension_numbers = #tpu.dot_dimension_numbers<[1], [0], [0], [1], [0, 0, 1, 1], [], []>} : vector<1x32xf32>, vector<32x32xf32>, vector<1x32xf32> -> vector<1x32xf32>
    %146 = arith.addf %145, %144 : vector<1x32xf32>
    %cst_63 = arith.constant 5.000000e-01 : f32
    %147 = vector.broadcast %cst_63 : f32 to vector<1x32xf32>
    %148 = arith.mulf %147, %146 : vector<1x32xf32>
    %cst_64 = arith.constant 0.707106769 : f32
    %149 = vector.broadcast %cst_64 : f32 to vector<1x32xf32>
    %150 = arith.mulf %146, %149 : vector<1x32xf32>
    %151 = math.erf %150 : vector<1x32xf32>
    %cst_65 = arith.constant 1.000000e+00 : f32
    %152 = vector.broadcast %cst_65 : f32 to vector<1x32xf32>
    %153 = arith.addf %152, %151 : vector<1x32xf32>
    %154 = arith.mulf %148, %153 : vector<1x32xf32>
    %c640 = arith.constant 640 : index
    %c0_66 = arith.constant 0 : index
    %155 = vector.load %arg0[%c640, %c0_66] : memref<720x128xf32, #tpu.memory_space<vmem>>, vector<32x32xf32>
    %c705 = arith.constant 705 : index
    %c0_67 = arith.constant 0 : index
    %156 = vector.load %arg0[%c705, %c0_67] : memref<720x128xf32, #tpu.memory_space<vmem>>, vector<1x32xf32>
    %cst_68 = arith.constant dense<0.000000e+00> : vector<1x32xf32>
    %157 = tpu.matmul %154, %155, %cst_68 {dimension_numbers = #tpu.dot_dimension_numbers<[1], [0], [0], [1], [0, 0, 1, 1], [], []>} : vector<1x32xf32>, vector<32x32xf32>, vector<1x32xf32> -> vector<1x32xf32>
    %158 = arith.addf %157, %156 : vector<1x32xf32>
    %cst_69 = arith.constant 5.000000e-01 : f32
    %159 = vector.broadcast %cst_69 : f32 to vector<1x32xf32>
    %160 = arith.mulf %159, %158 : vector<1x32xf32>
    %cst_70 = arith.constant 0.707106769 : f32
    %161 = vector.broadcast %cst_70 : f32 to vector<1x32xf32>
    %162 = arith.mulf %158, %161 : vector<1x32xf32>
    %163 = math.erf %162 : vector<1x32xf32>
    %cst_71 = arith.constant 1.000000e+00 : f32
    %164 = vector.broadcast %cst_71 : f32 to vector<1x32xf32>
    %165 = arith.addf %164, %163 : vector<1x32xf32>
    %166 = arith.mulf %160, %165 : vector<1x32xf32>
    %c672 = arith.constant 672 : index
    %c0_72 = arith.constant 0 : index
    %167 = vector.load %arg0[%c672, %c0_72] : memref<720x128xf32, #tpu.memory_space<vmem>>, vector<32x32xf32>
    %c706 = arith.constant 706 : index
    %c0_73 = arith.constant 0 : index
    %168 = vector.load %arg0[%c706, %c0_73] : memref<720x128xf32, #tpu.memory_space<vmem>>, vector<1x32xf32>
    %cst_74 = arith.constant dense<0.000000e+00> : vector<1x32xf32>
    %169 = tpu.matmul %166, %167, %cst_74 {dimension_numbers = #tpu.dot_dimension_numbers<[1], [0], [0], [1], [0, 0, 1, 1], [], []>} : vector<1x32xf32>, vector<32x32xf32>, vector<1x32xf32> -> vector<1x32xf32>
    %170 = arith.addf %169, %168 : vector<1x32xf32>
    %cst_75 = arith.constant 5.000000e-01 : f32
    %171 = vector.broadcast %cst_75 : f32 to vector<1x32xf32>
    %172 = arith.mulf %171, %170 : vector<1x32xf32>
    %cst_76 = arith.constant 0.707106769 : f32
    %173 = vector.broadcast %cst_76 : f32 to vector<1x32xf32>
    %174 = arith.mulf %170, %173 : vector<1x32xf32>
    %175 = math.erf %174 : vector<1x32xf32>
    %cst_77 = arith.constant 1.000000e+00 : f32
    %176 = vector.broadcast %cst_77 : f32 to vector<1x32xf32>
    %177 = arith.addf %176, %175 : vector<1x32xf32>
    %178 = arith.mulf %172, %177 : vector<1x32xf32>
    %179 = vector.extract_strided_slice %178 {offsets = [0, 0], sizes = [1, 16], strides = [1, 1]} : vector<1x32xf32> to vector<1x16xf32>
    %180 = vector.extract_strided_slice %178 {offsets = [0, 16], sizes = [1, 16], strides = [1, 1]} : vector<1x32xf32> to vector<1x16xf32>
    %cst_78 = arith.constant 0.000000e+00 : f32
    %181 = vector.broadcast %cst_78 : f32 to vector<1x1xf32>
    %cst_79 = arith.constant 0.000000e+00 : f32
    %182 = vector.broadcast %cst_79 : f32 to vector<1x71xf32>
    %183 = tpu.concatenate %121, %181, %179, %106, %180, %133, %182 in 1 : vector<1x7xf32>, vector<1x1xf32>, vector<1x16xf32>, vector<1x16xf32>, vector<1x16xf32>, vector<1x1xf32>, vector<1x71xf32> -> vector<1x128xf32>
    %cst_80 = arith.constant 0.000000e+00 : f32
    %184 = vector.broadcast %cst_80 : f32 to vector<7x128xf32>
    %185 = tpu.concatenate %183, %184 in 0 : vector<1x128xf32>, vector<7x128xf32> -> vector<8x128xf32>
    %c0_81 = arith.constant 0 : index
    %c0_82 = arith.constant 0 : index
    %186 = vector.load %arg3[%c0_81, %c0_82] : memref<8x128xf32, #tpu.memory_space<vmem>>, vector<8x128xf32>
    tpu.vector_store %arg3[%c0_81, %c0_82], %185 {strides = array<i32>} : memref<8x128xf32, #tpu.memory_space<vmem>>, vector<8x128xf32>,
    return
  }
}

</mosaic_0001>

<llo_original>
// kernel: forward.1
$region0: #{forward.1}
  #allocation0 [shape = 'u32[]', space=smem, size = 0x4, offset = 0x4, fixed_abs, tag = 'smem constant byte address 0x4 - core index']
  #allocation1 [shape = 'u32[144,128]{1,0:T(1,128)}', space=vmem, size = 0x12000, scoped, tag = 'internal scratch']
  %s0 = inlined_call_operand.hbm [shape: f32[720,128], index: 0, kind: input, shape index: {}]
  %s1 = inlined_call_operand.vmem [shape: f32[16,64], index: 1, kind: input, shape index: {}]
  %s2 = inlined_call_operand.vmem [shape: f32[8,128], index: 2, kind: input, shape index: {}]
  %s3 = inlined_call_operand.vmem [shape: f32[8,128], index: 3, kind: output, shape index: {}]
  %s4 = sld [smem:[#allocation0]]
  $region26: #{forward.1} parent=0
    _
  %s6 = ssub.s32 1, %s4
  %s7 = scalar_select 0, %s6, %s4
  $region1: #{forward.1} parent=0
    #allocation2 [shape = 'u8[368640]{0}', space=vmem, size = 0x5a000, scoped, tag = 'input window, operand 0, single buffered']
    #allocation3 [shape = 's32[1]{0}', space=sflag, size = 0x4, scoped, tag = 'scoped memory for forward.1']
    %8 = vsyncpa [#allocation3], 0
    // Predicated region
    $region2: #{forward.1} parent=1 // pred_check
      _
    $region3: #{forward.1} parent=1 // pred_check_branch
      %10 = sbr.rel (0) target = $region5
    $region4: #{forward.1} parent=1 // pred_region
      %s12 = ssub.s32 11520, 11520
      %13 = vsyncadd [#allocation3], %s12
      %s14 = sshll.u32 [#allocation2], 4
      %s15 = int_to_ptr.vmem [resolvable:$true] %s14
      %20 = dma.hbm_to_vmem [thread:$0]  %s0, 11520, %s15, [#allocation3], 128, 128, 8
    $region5: #{forward.1} parent=1 // pred_fallthru
      _
    // Predicated region
    $region6: #{forward.1} parent=1 // pred_check
      _
    $region7: #{forward.1} parent=1 // pred_check_branch
      %22 = sbr.rel (0) target = $region9
    $region8: #{forward.1} parent=1 // pred_region
      _
    $region9: #{forward.1} parent=1 // pred_fallthru
      _
    // Predicated region
    $region10: #{forward.1} parent=1 // pred_check
      _
    $region11: #{forward.1} parent=1 // pred_check_branch
      %24 = sbr.rel (0) target = $region13
    $region12: #{forward.1} parent=1 // pred_region
      _
    $region13: #{forward.1} parent=1 // pred_fallthru
      _
    // Predicated region
    $region14: #{forward.1} parent=1 // pred_check
      _
    $region15: #{forward.1} parent=1 // pred_check_branch
      %26 = sbr.rel (0) target = $region17
    $region16: #{forward.1} parent=1 // pred_region
      %27 = dma.done [#allocation3], 11520
    $region17: #{forward.1} parent=1 // pred_fallthru
      _
    %v28 = vld [vmem:[%s1] sm:$0xff]
    %v29 = vld [vmem:[%s1 + $0x8] sm:$0xff]
    %v30 = vld [vmem:[#allocation2] sm:$0x1]
    %v31 = vld [vmem:[#allocation2 + $0x8] sm:$0xff]
    %v32 = vld [vmem:[#allocation2 + $0x10] sm:$0xff]
    %v33 = vld [vmem:[#allocation2 + $0x18] sm:$0xff]
    %v34 = vld [vmem:[#allocation2 + $0x20] sm:$0xff]
    %v35 = vld [vmem:[#allocation2 + $0x28] sm:$0xff]
    %v36 = vld [vmem:[#allocation2 + $0x30] sm:$0xff]
    %v37 = vld [vmem:[#allocation2 + $0x38] sm:$0xff]
    %v38 = vld [vmem:[#allocation2 + $0x40] sm:$0xff]
    %v39 = vmul.f32 %v28, %v28
    %v40 = vmul.f32 %v29, %v29
    %vm41 = vcmask 523264
    %v43 = vsel %vm41, %v28, 0
    %v46 = vsel %vm41, %v29, 0
    %v49 = vsel %vm41, %v39, 0
    %v52 = vsel %vm41, %v40, 0
    %54 = vmatprep.subr.mxu0 0.0
    %55 = vmatpush1.msra.mxu0 0.0
    %56 = vmatprep.subr.mxu0 0.0
    %57 = vmatpush1.msra.mxu0 0.0
    %58 = vmatprep.subr.mxu0 0.0
    %59 = vmatpush1.msra.mxu0 0.0
    %60 = vmatprep.subr.mxu0 0.0
    %61 = vmatpush1.msra.mxu0 0.0
    %62 = vmatprep.subr.mxu0 0.0
    %63 = vmatpush1.msra.mxu0 0.0
    %64 = vmatprep.subr.mxu0 0.0
    %65 = vmatpush1.msra.mxu0 0.0
    %66 = vmatprep.subr.mxu0 0.0
    %67 = vmatpush1.msra.mxu0 0.0
    %68 = vmatprep.subr.mxu0 0.0
    %69 = vmatpush1.msra.mxu0 0.0
    %70 = vmatprep.subr.mxu0 0.0
    %71 = vmatpush1.msra.mxu0 %v38
    %72 = vmatprep.subr.mxu0 0.0
    %73 = vmatpush1.msra.mxu0 %v37
    %74 = vmatprep.subr.mxu0 0.0
    %75 = vmatpush1.msra.mxu0 %v36
    %76 = vmatprep.subr.mxu0 0.0
    %77 = vmatpush1.msra.mxu0 %v35
    %78 = vmatprep.subr.mxu0 0.0
    %79 = vmatpush1.msra.mxu0 %v34
    %80 = vmatprep.subr.mxu0 0.0
    %81 = vmatpush1.msra.mxu0 %v33
    %82 = vmatprep.subr.mxu0 0.0
    %83 = vmatpush1.msra.mxu0 %v32
    %84 = vmatprep.subr.mxu0 0.0
    %85 = vmatpush1.msra.mxu0 %v31
    %86 = vmatprep.subr.mxu0 0.0
    %87 = vmatpush2.msra.mxu0 0.0
    %88 = vmatprep.subr.mxu0 0.0
    %89 = vmatpush2.msra.mxu0 0.0
    %90 = vmatprep.subr.mxu0 0.0
    %91 = vmatpush2.msra.mxu0 0.0
    %92 = vmatprep.subr.mxu0 0.0
    %93 = vmatpush2.msra.mxu0 0.0
    %94 = vmatprep.subr.mxu0 0.0
    %95 = vmatpush2.msra.mxu0 0.0
    %96 = vmatprep.subr.mxu0 0.0
    %97 = vmatpush2.msra.mxu0 0.0
    %98 = vmatprep.subr.mxu0 0.0
    %99 = vmatpush2.msra.mxu0 0.0
    %100 = vmatprep.subr.mxu0 0.0
    %101 = vmatpush2.msra.mxu0 0.0
    %102 = vmatprep.subr.mxu0 0.0
    %103 = vmatpush2.msra.mxu0 0.0
    %104 = vmatprep.subr.mxu0 0.0
    %105 = vmatpush2.msra.mxu0 0.0
    %106 = vmatprep.subr.mxu0 0.0
    %107 = vmatpush2.msra.mxu0 0.0
    %108 = vmatprep.subr.mxu0 0.0
    %109 = vmatpush2.msra.mxu0 0.0
    %110 = vmatprep.subr.mxu0 0.0
    %111 = vmatpush2.msra.mxu0 0.0
    %112 = vmatprep.subr.mxu0 0.0
    %113 = vmatpush2.msra.mxu0 0.0
    %114 = vmatprep.subr.mxu0 0.0
    %115 = vmatpush2.msra.mxu0 0.0
    %116 = vmatprep.subr.mxu0 0.0
    %117 = vmatpush2.msra.mxu0 0.0
    %118 = vmatprep.mubr.f32.mxu0 0.0
    %119 = vmatmul.mubr.f32.gmra.mxu0 %v43
    %v120 = vpop.f32.mrf.mxu0
    %v121 = vadd.f32 0.0, %v120
    %v122 = vpop.f32.mrf.mxu0
    %123 = vmatprep.mubr.f32.mxu0 0.0
    %124 = vmatmul.mubr.f32.gmra.mxu0 %v46
    %v125 = vpop.f32.mrf.mxu0
    %v126 = vadd.f32 0.0, %v125
    %v127 = vpop.f32.mrf.mxu0
    %128 = vmatprep.mubr.f32.mxu0 0.0
    %129 = vmatmul.mubr.f32.gmra.mxu0 %v49
    %v130 = vpop.f32.mrf.mxu0
    %v131 = vadd.f32 0.0, %v130
    %v132 = vpop.f32.mrf.mxu0
    %133 = vmatprep.mubr.f32.mxu0 0.0
    %134 = vmatmul.mubr.f32.gmra.mxu0 %v52
    %v135 = vpop.f32.mrf.mxu0
    %v136 = vadd.f32 0.0, %v135
    %v137 = vpop.f32.mrf.mxu0
    %138 = vdwg.mxu0
    %v139 = vsub.f32 %v28, %v121
    %v140 = vsub.f32 %v29, %v126
    %v141 = vmul.f32 %v121, %v121
    %v142 = vmul.f32 %v126, %v126
    %v143 = vsub.f32 %v131, %v141
    %v144 = vsub.f32 %v136, %v142
    %v145 = vadd.f32 %v143, 1e-05
    %v146 = vadd.f32 %v144, 1e-05
    %v147 = vrsqrt.pop %v145
    %v148 = vrsqrt.pop %v146
    %v149 = vmul.f32 %v139, %v147
    %v150 = vmul.f32 %v140, %v148
    %v151 = vlaneseq
    %v152 = vshrl.u32 %v151, 7
    %v153 = vsub.s32 0, %v152
    %v154 = vrot.slane %v30, %v153
    %v155 = vmul.f32 %v149, %v154
    %v156 = vmul.f32 %v150, %v154
    %158 = vrot.lane.b32.xlu0 %v154, 64
    %v159 = vpop.permute.xlu0 %158
    %v161 = vadd.f32 %v155, %v159
    %v162 = vadd.f32 %v156, %v159
    %v163 = vld [vmem:[#allocation2 + $0x48] sm:$0xff]
    %v164 = vld [vmem:[#allocation2 + $0x50] sm:$0xff]
    %v165 = vld [vmem:[#allocation2 + $0x58] sm:$0xff]
    %vm166 = vcmask 130048
    %v168 = vsel %vm166, %v163, 0
    %v171 = vsel %vm166, %v164, 0
    %v174 = vsel %vm166, %v165, 0
    %176 = vmatprep.subr.mxu0 0.0
    %177 = vmatpush1.msra.mxu0 0.0
    %178 = vmatprep.subr.mxu0 0.0
    %179 = vmatpush1.msra.mxu0 0.0
    %180 = vmatprep.subr.mxu0 0.0
    %181 = vmatpush1.msra.mxu0 0.0
    %182 = vmatprep.subr.mxu0 0.0
    %183 = vmatpush1.msra.mxu0 0.0
    %184 = vmatprep.subr.mxu0 0.0
    %185 = vmatpush1.msra.mxu0 0.0
    %186 = vmatprep.subr.mxu0 0.0
    %187 = vmatpush1.msra.mxu0 0.0
    %188 = vmatprep.subr.mxu0 0.0
    %189 = vmatpush1.msra.mxu0 0.0
    %190 = vmatprep.subr.mxu0 0.0
    %191 = vmatpush1.msra.mxu0 0.0
    %192 = vmatprep.subr.mxu0 0.0
    %193 = vmatpush1.msra.mxu0 0.0
    %194 = vmatprep.subr.mxu0 0.0
    %195 = vmatpush1.msra.mxu0 0.0
    %196 = vmatprep.subr.mxu0 0.0
    %197 = vmatpush1.msra.mxu0 0.0
    %198 = vmatprep.subr.mxu0 0.0
    %199 = vmatpush1.msra.mxu0 0.0
    %200 = vmatprep.subr.mxu0 0.0
    %201 = vmatpush1.msra.mxu0 0.0
    %202 = vmatprep.subr.mxu0 0.0
    %203 = vmatpush1.msra.mxu0 0.0
    %204 = vmatprep.subr.mxu0 0.0
    %205 = vmatpush1.msra.mxu0 %v162
    %206 = vmatprep.subr.mxu0 0.0
    %207 = vmatpush1.msra.mxu0 %v161
    %208 = vmatprep.subr.mxu0 0.0
    %209 = vmatpush2.msra.mxu0 0.0
    %210 = vmatprep.subr.mxu0 0.0
    %211 = vmatpush2.msra.mxu0 0.0
    %212 = vmatprep.subr.mxu0 0.0
    %213 = vmatpush2.msra.mxu0 0.0
    %214 = vmatprep.subr.mxu0 0.0
    %215 = vmatpush2.msra.mxu0 0.0
    %216 = vmatprep.subr.mxu0 0.0
    %217 = vmatpush2.msra.mxu0 0.0
    %218 = vmatprep.subr.mxu0 0.0
    %219 = vmatpush2.msra.mxu0 0.0
    %220 = vmatprep.subr.mxu0 0.0
    %221 = vmatpush2.msra.mxu0 0.0
    %222 = vmatprep.subr.mxu0 0.0
    %223 = vmatpush2.msra.mxu0 0.0
    %224 = vmatprep.subr.mxu0 0.0
    %225 = vmatpush2.msra.mxu0 0.0
    %226 = vmatprep.subr.mxu0 0.0
    %227 = vmatpush2.msra.mxu0 0.0
    %228 = vmatprep.subr.mxu0 0.0
    %229 = vmatpush2.msra.mxu0 0.0
    %230 = vmatprep.subr.mxu0 0.0
    %231 = vmatpush2.msra.mxu0 0.0
    %232 = vmatprep.subr.mxu0 0.0
    %233 = vmatpush2.msra.mxu0 0.0
    %234 = vmatprep.subr.mxu0 0.0
    %235 = vmatpush2.msra.mxu0 0.0
    %236 = vmatprep.subr.mxu0 0.0
    %237 = vmatpush2.msra.mxu0 0.0
    %238 = vmatprep.subr.mxu0 0.0
    %239 = vmatpush2.msra.mxu0 0.0
    %240 = vmatprep.mubr.f32.mxu0 0.0
    %241 = vmatmul.mubr.f32.gmra.mxu0 %v168
    %v242 = vpop.f32.mrf.mxu0
    %v243 = vadd.f32 0.0, %v242
    %v244 = vpop.f32.mrf.mxu0
    %245 = vmatprep.mubr.f32.mxu0 0.0
    %246 = vmatmul.mubr.f32.gmra.mxu0 %v171
    %v247 = vpop.f32.mrf.mxu0
    %v248 = vadd.f32 0.0, %v247
    %v249 = vpop.f32.mrf.mxu0
    %250 = vmatprep.mubr.f32.mxu0 0.0
    %251 = vmatmul.mubr.f32.gmra.mxu0 %v174
    %v252 = vpop.f32.mrf.mxu0
    %v253 = vadd.f32 0.0, %v252
    %v254 = vpop.f32.mrf.mxu0
    %255 = vdwg.mxu0
    %v256 = vld [vmem:[#allocation2 + $0x60] sm:$0xff]
    %v257 = vld [vmem:[#allocation2 + $0x68] sm:$0xff]
    %v258 = vld [vmem:[#allocation2 + $0x70] sm:$0xff]
    %v259 = vld [vmem:[#allocation2 + $0x78] sm:$0xff]
    %v260 = vld [vmem:[#allocation2 + $0x80] sm:$0xff]
    %v261 = vld [vmem:[#allocation2 + $0x88] sm:$0xff]
    %v262 = vld [vmem:[#allocation2 + $0x90] sm:$0xff]
    %v263 = vld [vmem:[#allocation2 + $0x98] sm:$0xff]
    %v264 = vld [vmem:[#allocation2 + $0xa0] sm:$0xff]
    %v265 = vld [vmem:[#allocation2 + $0xa8] sm:$0xff]
    %v266 = vld [vmem:[#allocation2 + $0xb0] sm:$0xff]
    %v267 = vld [vmem:[#allocation2 + $0xb8] sm:$0xff]
    %v268 = vld [vmem:[#allocation2 + $0xc0] sm:$0xff]
    %v269 = vld [vmem:[#allocation2 + $0xc8] sm:$0xff]
    %v270 = vld [vmem:[#allocation2 + $0xd0] sm:$0xff]
    %v271 = vld [vmem:[#allocation2 + $0xd8] sm:$0xff]
    %v273 = vsel %vm41, %v248, 0
    %275 = vmatprep.subr.mxu0 0.0
    %276 = vmatpush1.msra.mxu0 0.0
    %277 = vmatprep.subr.mxu0 0.0
    %278 = vmatpush1.msra.mxu0 0.0
    %279 = vmatprep.subr.mxu0 0.0
    %280 = vmatpush1.msra.mxu0 0.0
    %281 = vmatprep.subr.mxu0 0.0
    %282 = vmatpush1.msra.mxu0 0.0
    %283 = vmatprep.subr.mxu0 0.0
    %284 = vmatpush1.msra.mxu0 0.0
    %285 = vmatprep.subr.mxu0 0.0
    %286 = vmatpush1.msra.mxu0 0.0
    %287 = vmatprep.subr.mxu0 0.0
    %288 = vmatpush1.msra.mxu0 0.0
    %289 = vmatprep.subr.mxu0 0.0
    %290 = vmatpush1.msra.mxu0 0.0
    %291 = vmatprep.subr.mxu0 0.0
    %292 = vmatpush1.msra.mxu0 %v271
    %293 = vmatprep.subr.mxu0 0.0
    %294 = vmatpush1.msra.mxu0 %v270
    %295 = vmatprep.subr.mxu0 0.0
    %296 = vmatpush1.msra.mxu0 %v269
    %297 = vmatprep.subr.mxu0 0.0
    %298 = vmatpush1.msra.mxu0 %v268
    %299 = vmatprep.subr.mxu0 0.0
    %300 = vmatpush1.msra.mxu0 %v267
    %301 = vmatprep.subr.mxu0 0.0
    %302 = vmatpush1.msra.mxu0 %v266
    %303 = vmatprep.subr.mxu0 0.0
    %304 = vmatpush1.msra.mxu0 %v265
    %305 = vmatprep.subr.mxu0 0.0
    %306 = vmatpush1.msra.mxu0 %v264
    %307 = vmatprep.subr.mxu0 0.0
    %308 = vmatpush2.msra.mxu0 0.0
    %309 = vmatprep.subr.mxu0 0.0
    %310 = vmatpush2.msra.mxu0 0.0
    %311 = vmatprep.subr.mxu0 0.0
    %312 = vmatpush2.msra.mxu0 0.0
    %313 = vmatprep.subr.mxu0 0.0
    %314 = vmatpush2.msra.mxu0 0.0
    %315 = vmatprep.subr.mxu0 0.0
    %316 = vmatpush2.msra.mxu0 0.0
    %317 = vmatprep.subr.mxu0 0.0
    %318 = vmatpush2.msra.mxu0 0.0
    %319 = vmatprep.subr.mxu0 0.0
    %320 = vmatpush2.msra.mxu0 0.0
    %321 = vmatprep.subr.mxu0 0.0
    %322 = vmatpush2.msra.mxu0 0.0
    %323 = vmatprep.subr.mxu0 0.0
    %324 = vmatpush2.msra.mxu0 0.0
    %325 = vmatprep.subr.mxu0 0.0
    %326 = vmatpush2.msra.mxu0 0.0
    %327 = vmatprep.subr.mxu0 0.0
    %328 = vmatpush2.msra.mxu0 0.0
    %329 = vmatprep.subr.mxu0 0.0
    %330 = vmatpush2.msra.mxu0 0.0
    %331 = vmatprep.subr.mxu0 0.0
    %332 = vmatpush2.msra.mxu0 0.0
    %333 = vmatprep.subr.mxu0 0.0
    %334 = vmatpush2.msra.mxu0 0.0
    %335 = vmatprep.subr.mxu0 0.0
    %336 = vmatpush2.msra.mxu0 0.0
    %337 = vmatprep.subr.mxu0 0.0
    %338 = vmatpush2.msra.mxu0 0.0
    %339 = vmatprep.mubr.f32.mxu0 0.0
    %340 = vmatmul.mubr.f32.gmra.mxu0 %v273
    %v341 = vpop.f32.mrf.mxu0
    %v342 = vadd.f32 0.0, %v341
    %v343 = vpop.f32.mrf.mxu0
    %344 = vdwg.mxu0
    %v346 = vsel %vm41, %v243, 0
    %348 = vmatprep.subr.mxu0 0.0
    %349 = vmatpush1.msra.mxu0 0.0
    %350 = vmatprep.subr.mxu0 0.0
    %351 = vmatpush1.msra.mxu0 0.0
    %352 = vmatprep.subr.mxu0 0.0
    %353 = vmatpush1.msra.mxu0 0.0
    %354 = vmatprep.subr.mxu0 0.0
    %355 = vmatpush1.msra.mxu0 0.0
    %356 = vmatprep.subr.mxu0 0.0
    %357 = vmatpush1.msra.mxu0 0.0
    %358 = vmatprep.subr.mxu0 0.0
    %359 = vmatpush1.msra.mxu0 0.0
    %360 = vmatprep.subr.mxu0 0.0
    %361 = vmatpush1.msra.mxu0 0.0
    %362 = vmatprep.subr.mxu0 0.0
    %363 = vmatpush1.msra.mxu0 0.0
    %364 = vmatprep.subr.mxu0 0.0
    %365 = vmatpush1.msra.mxu0 %v263
    %366 = vmatprep.subr.mxu0 0.0
    %367 = vmatpush1.msra.mxu0 %v262
    %368 = vmatprep.subr.mxu0 0.0
    %369 = vmatpush1.msra.mxu0 %v261
    %370 = vmatprep.subr.mxu0 0.0
    %371 = vmatpush1.msra.mxu0 %v260
    %372 = vmatprep.subr.mxu0 0.0
    %373 = vmatpush1.msra.mxu0 %v259
    %374 = vmatprep.subr.mxu0 0.0
    %375 = vmatpush1.msra.mxu0 %v258
    %376 = vmatprep.subr.mxu0 0.0
    %377 = vmatpush1.msra.mxu0 %v257
    %378 = vmatprep.subr.mxu0 0.0
    %379 = vmatpush1.msra.mxu0 %v256
    %380 = vmatprep.subr.mxu0 0.0
    %381 = vmatpush2.msra.mxu0 0.0
    %382 = vmatprep.subr.mxu0 0.0
    %383 = vmatpush2.msra.mxu0 0.0
    %384 = vmatprep.subr.mxu0 0.0
    %385 = vmatpush2.msra.mxu0 0.0
    %386 = vmatprep.subr.mxu0 0.0
    %387 = vmatpush2.msra.mxu0 0.0
    %388 = vmatprep.subr.mxu0 0.0
    %389 = vmatpush2.msra.mxu0 0.0
    %390 = vmatprep.subr.mxu0 0.0
    %391 = vmatpush2.msra.mxu0 0.0
    %392 = vmatprep.subr.mxu0 0.0
    %393 = vmatpush2.msra.mxu0 0.0
    %394 = vmatprep.subr.mxu0 0.0
    %395 = vmatpush2.msra.mxu0 0.0
    %396 = vmatprep.subr.mxu0 0.0
    %397 = vmatpush2.msra.mxu0 0.0
    %398 = vmatprep.subr.mxu0 0.0
    %399 = vmatpush2.msra.mxu0 0.0
    %400 = vmatprep.subr.mxu0 0.0
    %401 = vmatpush2.msra.mxu0 0.0
    %402 = vmatprep.subr.mxu0 0.0
    %403 = vmatpush2.msra.mxu0 0.0
    %404 = vmatprep.subr.mxu0 0.0
    %405 = vmatpush2.msra.mxu0 0.0
    %406 = vmatprep.subr.mxu0 0.0
    %407 = vmatpush2.msra.mxu0 0.0
    %408 = vmatprep.subr.mxu0 0.0
    %409 = vmatpush2.msra.mxu0 0.0
    %410 = vmatprep.subr.mxu0 0.0
    %411 = vmatpush2.msra.mxu0 0.0
    %412 = vmatprep.mubr.f32.mxu0 0.0
    %413 = vmatmul.mubr.f32.gmra.mxu0 %v346
    %v414 = vpop.f32.mrf.mxu0
    %v415 = vadd.f32 %v342, %v414
    %v416 = vpop.f32.mrf.mxu0
    %417 = vdwg.mxu0
    %v418 = vld [vmem:[#allocation2 + $0xe0] sm:$0xff]
    %v419 = vld [vmem:[#allocation2 + $0xe8] sm:$0xff]
    %v420 = vld [vmem:[#allocation2 + $0xf0] sm:$0xff]
    %v421 = vld [vmem:[#allocation2 + $0xf8] sm:$0xff]
    %v422 = vld [vmem:[#allocation2 + $0x100] sm:$0xff]
    %v423 = vld [vmem:[#allocation2 + $0x108] sm:$0xff]
    %v424 = vld [vmem:[#allocation2 + $0x110] sm:$0xff]
    %v425 = vld [vmem:[#allocation2 + $0x118] sm:$0xff]
    %v427 = vsel %vm41, %v253, 0
    %429 = vmatprep.subr.mxu0 0.0
    %430 = vmatpush1.msra.mxu0 0.0
    %431 = vmatprep.subr.mxu0 0.0
    %432 = vmatpush1.msra.mxu0 0.0
    %433 = vmatprep.subr.mxu0 0.0
    %434 = vmatpush1.msra.mxu0 0.0
    %435 = vmatprep.subr.mxu0 0.0
    %436 = vmatpush1.msra.mxu0 0.0
    %437 = vmatprep.subr.mxu0 0.0
    %438 = vmatpush1.msra.mxu0 0.0
    %439 = vmatprep.subr.mxu0 0.0
    %440 = vmatpush1.msra.mxu0 0.0
    %441 = vmatprep.subr.mxu0 0.0
    %442 = vmatpush1.msra.mxu0 0.0
    %443 = vmatprep.subr.mxu0 0.0
    %444 = vmatpush1.msra.mxu0 0.0
    %445 = vmatprep.subr.mxu0 0.0
    %446 = vmatpush1.msra.mxu0 %v425
    %447 = vmatprep.subr.mxu0 0.0
    %448 = vmatpush1.msra.mxu0 %v424
    %449 = vmatprep.subr.mxu0 0.0
    %450 = vmatpush1.msra.mxu0 %v423
    %451 = vmatprep.subr.mxu0 0.0
    %452 = vmatpush1.msra.mxu0 %v422
    %453 = vmatprep.subr.mxu0 0.0
    %454 = vmatpush1.msra.mxu0 %v421
    %455 = vmatprep.subr.mxu0 0.0
    %456 = vmatpush1.msra.mxu0 %v420
    %457 = vmatprep.subr.mxu0 0.0
    %458 = vmatpush1.msra.mxu0 %v419
    %459 = vmatprep.subr.mxu0 0.0
    %460 = vmatpush1.msra.mxu0 %v418
    %461 = vmatprep.subr.mxu0 0.0
    %462 = vmatpush2.msra.mxu0 0.0
    %463 = vmatprep.subr.mxu0 0.0
    %464 = vmatpush2.msra.mxu0 0.0
    %465 = vmatprep.subr.mxu0 0.0
    %466 = vmatpush2.msra.mxu0 0.0
    %467 = vmatprep.subr.mxu0 0.0
    %468 = vmatpush2.msra.mxu0 0.0
    %469 = vmatprep.subr.mxu0 0.0
    %470 = vmatpush2.msra.mxu0 0.0
    %471 = vmatprep.subr.mxu0 0.0
    %472 = vmatpush2.msra.mxu0 0.0
    %473 = vmatprep.subr.mxu0 0.0
    %474 = vmatpush2.msra.mxu0 0.0
    %475 = vmatprep.subr.mxu0 0.0
    %476 = vmatpush2.msra.mxu0 0.0
    %477 = vmatprep.subr.mxu0 0.0
    %478 = vmatpush2.msra.mxu0 0.0
    %479 = vmatprep.subr.mxu0 0.0
    %480 = vmatpush2.msra.mxu0 0.0
    %481 = vmatprep.subr.mxu0 0.0
    %482 = vmatpush2.msra.mxu0 0.0
    %483 = vmatprep.subr.mxu0 0.0
    %484 = vmatpush2.msra.mxu0 0.0
    %485 = vmatprep.subr.mxu0 0.0
    %486 = vmatpush2.msra.mxu0 0.0
    %487 = vmatprep.subr.mxu0 0.0
    %488 = vmatpush2.msra.mxu0 0.0
    %489 = vmatprep.subr.mxu0 0.0
    %490 = vmatpush2.msra.mxu0 0.0
    %491 = vmatprep.subr.mxu0 0.0
    %492 = vmatpush2.msra.mxu0 0.0
    %493 = vmatprep.mubr.f32.mxu0 0.0
    %494 = vmatmul.mubr.f32.gmra.mxu0 %v427
    %v495 = vpop.f32.mrf.mxu0
    %v496 = vadd.f32 0.0, %v495
    %v497 = vpop.f32.mrf.mxu0
    %498 = vdwg.mxu0
    %v499 = vadd.f32 %v415, %v496
    %v500 = vld [vmem:[#allocation2 + $0x120] sm:$0x1]
    %v501 = vlaneseq
    %v502 = vshrl.u32 %v501, 7
    %v503 = vsub.s32 0, %v502
    %v504 = vrot.slane %v500, %v503
    %v505 = vadd.f32 %v499, %v504
    %v506 = vmul.f32 %v505, 0.5
    %v507 = vmul.f32 %v505, 0.70710677
    %v508 = verf.f32.pop %v507
    %v509 = vadd.f32 %v508, 1.0
    %v510 = vmul.f32 %v506, %v509
    %v511 = vld [vmem:[#allocation2 + $0x128] sm:$0xff]
    %v512 = vld [vmem:[#allocation2 + $0x130] sm:$0xff]
    %v513 = vld [vmem:[#allocation2 + $0x138] sm:$0xff]
    %vm514 = vcmask 64512
    %v516 = vsel %vm514, %v511, 0
    %v519 = vsel %vm514, %v512, 0
    %v522 = vsel %vm514, %v513, 0
    %524 = vmatprep.subr.mxu0 0.0
    %525 = vmatpush1.msra.mxu0 0.0
    %526 = vmatprep.subr.mxu0 0.0
    %527 = vmatpush1.msra.mxu0 0.0
    %528 = vmatprep.subr.mxu0 0.0
    %529 = vmatpush1.msra.mxu0 0.0
    %530 = vmatprep.subr.mxu0 0.0
    %531 = vmatpush1.msra.mxu0 0.0
    %532 = vmatprep.subr.mxu0 0.0
    %533 = vmatpush1.msra.mxu0 0.0
    %534 = vmatprep.subr.mxu0 0.0
    %535 = vmatpush1.msra.mxu0 0.0
    %536 = vmatprep.subr.mxu0 0.0
    %537 = vmatpush1.msra.mxu0 0.0
    %538 = vmatprep.subr.mxu0 0.0
    %539 = vmatpush1.msra.mxu0 0.0
    %540 = vmatprep.subr.mxu0 0.0
    %541 = vmatpush1.msra.mxu0 0.0
    %542 = vmatprep.subr.mxu0 0.0
    %543 = vmatpush1.msra.mxu0 0.0
    %544 = vmatprep.subr.mxu0 0.0
    %545 = vmatpush1.msra.mxu0 0.0
    %546 = vmatprep.subr.mxu0 0.0
    %547 = vmatpush1.msra.mxu0 0.0
    %548 = vmatprep.subr.mxu0 0.0
    %549 = vmatpush1.msra.mxu0 0.0
    %550 = vmatprep.subr.mxu0 0.0
    %551 = vmatpush1.msra.mxu0 0.0
    %552 = vmatprep.subr.mxu0 0.0
    %553 = vmatpush1.msra.mxu0 0.0
    %554 = vmatprep.subr.mxu0 0.0
    %555 = vmatpush1.msra.mxu0 %v510
    %556 = vmatprep.subr.mxu0 0.0
    %557 = vmatpush2.msra.mxu0 0.0
    %558 = vmatprep.subr.mxu0 0.0
    %559 = vmatpush2.msra.mxu0 0.0
    %560 = vmatprep.subr.mxu0 0.0
    %561 = vmatpush2.msra.mxu0 0.0
    %562 = vmatprep.subr.mxu0 0.0
    %563 = vmatpush2.msra.mxu0 0.0
    %564 = vmatprep.subr.mxu0 0.0
    %565 = vmatpush2.msra.mxu0 0.0
    %566 = vmatprep.subr.mxu0 0.0
    %567 = vmatpush2.msra.mxu0 0.0
    %568 = vmatprep.subr.mxu0 0.0
    %569 = vmatpush2.msra.mxu0 0.0
    %570 = vmatprep.subr.mxu0 0.0
    %571 = vmatpush2.msra.mxu0 0.0
    %572 = vmatprep.subr.mxu0 0.0
    %573 = vmatpush2.msra.mxu0 0.0
    %574 = vmatprep.subr.mxu0 0.0
    %575 = vmatpush2.msra.mxu0 0.0
    %576 = vmatprep.subr.mxu0 0.0
    %577 = vmatpush2.msra.mxu0 0.0
    %578 = vmatprep.subr.mxu0 0.0
    %579 = vmatpush2.msra.mxu0 0.0
    %580 = vmatprep.subr.mxu0 0.0
    %581 = vmatpush2.msra.mxu0 0.0
    %582 = vmatprep.subr.mxu0 0.0
    %583 = vmatpush2.msra.mxu0 0.0
    %584 = vmatprep.subr.mxu0 0.0
    %585 = vmatpush2.msra.mxu0 0.0
    %586 = vmatprep.subr.mxu0 0.0
    %587 = vmatpush2.msra.mxu0 0.0
    %588 = vmatprep.mubr.f32.mxu0 0.0
    %589 = vmatmul.mubr.f32.gmra.mxu0 %v516
    %v590 = vpop.f32.mrf.mxu0
    %v591 = vadd.f32 0.0, %v590
    %v592 = vpop.f32.mrf.mxu0
    %593 = vmatprep.mubr.f32.mxu0 0.0
    %594 = vmatmul.mubr.f32.gmra.mxu0 %v519
    %v595 = vpop.f32.mrf.mxu0
    %v596 = vadd.f32 0.0, %v595
    %v597 = vpop.f32.mrf.mxu0
    %598 = vmatprep.mubr.f32.mxu0 0.0
    %599 = vmatmul.mubr.f32.gmra.mxu0 %v522
    %v600 = vpop.f32.mrf.mxu0
    %v601 = vadd.f32 0.0, %v600
    %v602 = vpop.f32.mrf.mxu0
    %603 = vdwg.mxu0
    %v604 = vld [vmem:[#allocation2 + $0x140] sm:$0xff]
    %v605 = vld [vmem:[#allocation2 + $0x148] sm:$0xff]
    %v606 = vld [vmem:[#allocation2 + $0x150] sm:$0xff]
    %v607 = vld [vmem:[#allocation2 + $0x158] sm:$0xff]
    %v608 = vld [vmem:[#allocation2 + $0x160] sm:$0xff]
    %v609 = vld [vmem:[#allocation2 + $0x168] sm:$0xff]
    %v610 = vld [vmem:[#allocation2 + $0x170] sm:$0xff]
    %v611 = vld [vmem:[#allocation2 + $0x178] sm:$0xff]
    %v612 = vld [vmem:[#allocation2 + $0x180] sm:$0xff]
    %v613 = vld [vmem:[#allocation2 + $0x188] sm:$0xff]
    %v614 = vld [vmem:[#allocation2 + $0x190] sm:$0xff]
    %v615 = vld [vmem:[#allocation2 + $0x198] sm:$0xff]
    %v616 = vld [vmem:[#allocation2 + $0x1a0] sm:$0xff]
    %v617 = vld [vmem:[#allocation2 + $0x1a8] sm:$0xff]
    %vm618 = vcmask 457728
    %v620 = vsel %vm618, %v596, 0
    %622 = vmatprep.subr.mxu0 0.0
    %623 = vmatpush1.msra.mxu0 0.0
    %624 = vmatprep.subr.mxu0 0.0
    %625 = vmatpush1.msra.mxu0 0.0
    %626 = vmatprep.subr.mxu0 0.0
    %627 = vmatpush1.msra.mxu0 0.0
    %628 = vmatprep.subr.mxu0 0.0
    %629 = vmatpush1.msra.mxu0 0.0
    %630 = vmatprep.subr.mxu0 0.0
    %631 = vmatpush1.msra.mxu0 0.0
    %632 = vmatprep.subr.mxu0 0.0
    %633 = vmatpush1.msra.mxu0 0.0
    %634 = vmatprep.subr.mxu0 0.0
    %635 = vmatpush1.msra.mxu0 0.0
    %636 = vmatprep.subr.mxu0 0.0
    %637 = vmatpush1.msra.mxu0 0.0
    %638 = vmatprep.subr.mxu0 0.0
    %639 = vmatpush1.msra.mxu0 0.0
    %640 = vmatprep.subr.mxu0 0.0
    %641 = vmatpush1.msra.mxu0 %v617
    %642 = vmatprep.subr.mxu0 0.0
    %643 = vmatpush1.msra.mxu0 %v616
    %644 = vmatprep.subr.mxu0 0.0
    %645 = vmatpush1.msra.mxu0 %v615
    %646 = vmatprep.subr.mxu0 0.0
    %647 = vmatpush1.msra.mxu0 %v614
    %648 = vmatprep.subr.mxu0 0.0
    %649 = vmatpush1.msra.mxu0 %v613
    %650 = vmatprep.subr.mxu0 0.0
    %651 = vmatpush1.msra.mxu0 %v612
    %652 = vmatprep.subr.mxu0 0.0
    %653 = vmatpush1.msra.mxu0 %v611
    %654 = vmatprep.subr.mxu0 0.0
    %655 = vmatpush2.msra.mxu0 0.0
    %656 = vmatprep.subr.mxu0 0.0
    %657 = vmatpush2.msra.mxu0 0.0
    %658 = vmatprep.subr.mxu0 0.0
    %659 = vmatpush2.msra.mxu0 0.0
    %660 = vmatprep.subr.mxu0 0.0
    %661 = vmatpush2.msra.mxu0 0.0
    %662 = vmatprep.subr.mxu0 0.0
    %663 = vmatpush2.msra.mxu0 0.0
    %664 = vmatprep.subr.mxu0 0.0
    %665 = vmatpush2.msra.mxu0 0.0
    %666 = vmatprep.subr.mxu0 0.0
    %667 = vmatpush2.msra.mxu0 0.0
    %668 = vmatprep.subr.mxu0 0.0
    %669 = vmatpush2.msra.mxu0 0.0
    %670 = vmatprep.subr.mxu0 0.0
    %671 = vmatpush2.msra.mxu0 0.0
    %672 = vmatprep.subr.mxu0 0.0
    %673 = vmatpush2.msra.mxu0 0.0
    %674 = vmatprep.subr.mxu0 0.0
    %675 = vmatpush2.msra.mxu0 0.0
    %676 = vmatprep.subr.mxu0 0.0
    %677 = vmatpush2.msra.mxu0 0.0
    %678 = vmatprep.subr.mxu0 0.0
    %679 = vmatpush2.msra.mxu0 0.0
    %680 = vmatprep.subr.mxu0 0.0
    %681 = vmatpush2.msra.mxu0 0.0
    %682 = vmatprep.subr.mxu0 0.0
    %683 = vmatpush2.msra.mxu0 0.0
    %684 = vmatprep.subr.mxu0 0.0
    %685 = vmatpush2.msra.mxu0 0.0
    %686 = vmatprep.mubr.f32.mxu0 0.0
    %687 = vmatmul.mubr.f32.gmra.mxu0 %v620
    %v688 = vpop.f32.mrf.mxu0
    %v689 = vadd.f32 0.0, %v688
    %v690 = vpop.f32.mrf.mxu0
    %691 = vdwg.mxu0
    %v693 = vsel %vm618, %v591, 0
    %695 = vmatprep.subr.mxu0 0.0
    %696 = vmatpush1.msra.mxu0 0.0
    %697 = vmatprep.subr.mxu0 0.0
    %698 = vmatpush1.msra.mxu0 0.0
    %699 = vmatprep.subr.mxu0 0.0
    %700 = vmatpush1.msra.mxu0 0.0
    %701 = vmatprep.subr.mxu0 0.0
    %702 = vmatpush1.msra.mxu0 0.0
    %703 = vmatprep.subr.mxu0 0.0
    %704 = vmatpush1.msra.mxu0 0.0
    %705 = vmatprep.subr.mxu0 0.0
    %706 = vmatpush1.msra.mxu0 0.0
    %707 = vmatprep.subr.mxu0 0.0
    %708 = vmatpush1.msra.mxu0 0.0
    %709 = vmatprep.subr.mxu0 0.0
    %710 = vmatpush1.msra.mxu0 0.0
    %711 = vmatprep.subr.mxu0 0.0
    %712 = vmatpush1.msra.mxu0 0.0
    %713 = vmatprep.subr.mxu0 0.0
    %714 = vmatpush1.msra.mxu0 %v610
    %715 = vmatprep.subr.mxu0 0.0
    %716 = vmatpush1.msra.mxu0 %v609
    %717 = vmatprep.subr.mxu0 0.0
    %718 = vmatpush1.msra.mxu0 %v608
    %719 = vmatprep.subr.mxu0 0.0
    %720 = vmatpush1.msra.mxu0 %v607
    %721 = vmatprep.subr.mxu0 0.0
    %722 = vmatpush1.msra.mxu0 %v606
    %723 = vmatprep.subr.mxu0 0.0
    %724 = vmatpush1.msra.mxu0 %v605
    %725 = vmatprep.subr.mxu0 0.0
    %726 = vmatpush1.msra.mxu0 %v604
    %727 = vmatprep.subr.mxu0 0.0
    %728 = vmatpush2.msra.mxu0 0.0
    %729 = vmatprep.subr.mxu0 0.0
    %730 = vmatpush2.msra.mxu0 0.0
    %731 = vmatprep.subr.mxu0 0.0
    %732 = vmatpush2.msra.mxu0 0.0
    %733 = vmatprep.subr.mxu0 0.0
    %734 = vmatpush2.msra.mxu0 0.0
    %735 = vmatprep.subr.mxu0 0.0
    %736 = vmatpush2.msra.mxu0 0.0
    %737 = vmatprep.subr.mxu0 0.0
    %738 = vmatpush2.msra.mxu0 0.0
    %739 = vmatprep.subr.mxu0 0.0
    %740 = vmatpush2.msra.mxu0 0.0
    %741 = vmatprep.subr.mxu0 0.0
    %742 = vmatpush2.msra.mxu0 0.0
    %743 = vmatprep.subr.mxu0 0.0
    %744 = vmatpush2.msra.mxu0 0.0
    %745 = vmatprep.subr.mxu0 0.0
    %746 = vmatpush2.msra.mxu0 0.0
    %747 = vmatprep.subr.mxu0 0.0
    %748 = vmatpush2.msra.mxu0 0.0
    %749 = vmatprep.subr.mxu0 0.0
    %750 = vmatpush2.msra.mxu0 0.0
    %751 = vmatprep.subr.mxu0 0.0
    %752 = vmatpush2.msra.mxu0 0.0
    %753 = vmatprep.subr.mxu0 0.0
    %754 = vmatpush2.msra.mxu0 0.0
    %755 = vmatprep.subr.mxu0 0.0
    %756 = vmatpush2.msra.mxu0 0.0
    %757 = vmatprep.subr.mxu0 0.0
    %758 = vmatpush2.msra.mxu0 0.0
    %759 = vmatprep.mubr.f32.mxu0 0.0
    %760 = vmatmul.mubr.f32.gmra.mxu0 %v693
    %v761 = vpop.f32.mrf.mxu0
    %v762 = vadd.f32 %v689, %v761
    %v763 = vpop.f32.mrf.mxu0
    %764 = vdwg.mxu0
    %v765 = vld [vmem:[#allocation2 + $0x1b0] sm:$0xff]
    %v766 = vld [vmem:[#allocation2 + $0x1b8] sm:$0xff]
    %v767 = vld [vmem:[#allocation2 + $0x1c0] sm:$0xff]
    %v768 = vld [vmem:[#allocation2 + $0x1c8] sm:$0xff]
    %v769 = vld [vmem:[#allocation2 + $0x1d0] sm:$0xff]
    %v770 = vld [vmem:[#allocation2 + $0x1d8] sm:$0xff]
    %v771 = vld [vmem:[#allocation2 + $0x1e0] sm:$0xff]
    %v773 = vsel %vm618, %v601, 0
    %775 = vmatprep.subr.mxu0 0.0
    %776 = vmatpush1.msra.mxu0 0.0
    %777 = vmatprep.subr.mxu0 0.0
    %778 = vmatpush1.msra.mxu0 0.0
    %779 = vmatprep.subr.mxu0 0.0
    %780 = vmatpush1.msra.mxu0 0.0
    %781 = vmatprep.subr.mxu0 0.0
    %782 = vmatpush1.msra.mxu0 0.0
    %783 = vmatprep.subr.mxu0 0.0
    %784 = vmatpush1.msra.mxu0 0.0
    %785 = vmatprep.subr.mxu0 0.0
    %786 = vmatpush1.msra.mxu0 0.0
    %787 = vmatprep.subr.mxu0 0.0
    %788 = vmatpush1.msra.mxu0 0.0
    %789 = vmatprep.subr.mxu0 0.0
    %790 = vmatpush1.msra.mxu0 0.0
    %791 = vmatprep.subr.mxu0 0.0
    %792 = vmatpush1.msra.mxu0 0.0
    %793 = vmatprep.subr.mxu0 0.0
    %794 = vmatpush1.msra.mxu0 %v771
    %795 = vmatprep.subr.mxu0 0.0
    %796 = vmatpush1.msra.mxu0 %v770
    %797 = vmatprep.subr.mxu0 0.0
    %798 = vmatpush1.msra.mxu0 %v769
    %799 = vmatprep.subr.mxu0 0.0
    %800 = vmatpush1.msra.mxu0 %v768
    %801 = vmatprep.subr.mxu0 0.0
    %802 = vmatpush1.msra.mxu0 %v767
    %803 = vmatprep.subr.mxu0 0.0
    %804 = vmatpush1.msra.mxu0 %v766
    %805 = vmatprep.subr.mxu0 0.0
    %806 = vmatpush1.msra.mxu0 %v765
    %807 = vmatprep.subr.mxu0 0.0
    %808 = vmatpush2.msra.mxu0 0.0
    %809 = vmatprep.subr.mxu0 0.0
    %810 = vmatpush2.msra.mxu0 0.0
    %811 = vmatprep.subr.mxu0 0.0
    %812 = vmatpush2.msra.mxu0 0.0
    %813 = vmatprep.subr.mxu0 0.0
    %814 = vmatpush2.msra.mxu0 0.0
    %815 = vmatprep.subr.mxu0 0.0
    %816 = vmatpush2.msra.mxu0 0.0
    %817 = vmatprep.subr.mxu0 0.0
    %818 = vmatpush2.msra.mxu0 0.0
    %819 = vmatprep.subr.mxu0 0.0
    %820 = vmatpush2.msra.mxu0 0.0
    %821 = vmatprep.subr.mxu0 0.0
    %822 = vmatpush2.msra.mxu0 0.0
    %823 = vmatprep.subr.mxu0 0.0
    %824 = vmatpush2.msra.mxu0 0.0
    %825 = vmatprep.subr.mxu0 0.0
    %826 = vmatpush2.msra.mxu0 0.0
    %827 = vmatprep.subr.mxu0 0.0
    %828 = vmatpush2.msra.mxu0 0.0
    %829 = vmatprep.subr.mxu0 0.0
    %830 = vmatpush2.msra.mxu0 0.0
    %831 = vmatprep.subr.mxu0 0.0
    %832 = vmatpush2.msra.mxu0 0.0
    %833 = vmatprep.subr.mxu0 0.0
    %834 = vmatpush2.msra.mxu0 0.0
    %835 = vmatprep.subr.mxu0 0.0
    %836 = vmatpush2.msra.mxu0 0.0
    %837 = vmatprep.subr.mxu0 0.0
    %838 = vmatpush2.msra.mxu0 0.0
    %839 = vmatprep.mubr.f32.mxu0 0.0
    %840 = vmatmul.mubr.f32.gmra.mxu0 %v773
    %v841 = vpop.f32.mrf.mxu0
    %v842 = vadd.f32 0.0, %v841
    %v843 = vpop.f32.mrf.mxu0
    %844 = vdwg.mxu0
    %v845 = vadd.f32 %v762, %v842
    %v846 = vld [vmem:[#allocation2 + $0x1e8] sm:$0x1]
    %v847 = vlaneseq
    %v848 = vshrl.u32 %v847, 7
    %v849 = vsub.s32 0, %v848
    %v850 = vrot.slane %v846, %v849
    %v851 = vadd.f32 %v845, %v850
    %v852 = vmul.f32 %v851, 0.5
    %v853 = vmul.f32 %v851, 0.70710677
    %v854 = verf.f32.pop %v853
    %v855 = vadd.f32 %v854, 1.0
    %v856 = vmul.f32 %v852, %v855
    %v857 = vld [vmem:[#allocation2 + $0x1f0] sm:$0xff]
    %v858 = vmul.f32 %v856, %v857
    %vm859 = vcmask 392192
    %v860 = vsel %vm859, %v858, 0.0
    %v861 = vrot.slane %v860, 4
    %v862 = vadd.f32 %v860, %v861
    %v863 = vrot.slane %v862, 2
    %v864 = vadd.f32 %v862, %v863
    %v865 = vrot.slane %v864, 1
    %v866 = vadd.f32 %v864, %v865
    %868 = vrot.lane.b32.xlu0 %v866, 112
    %v869 = vpop.permute.xlu0 %868
    %v871 = vadd.f32 %v866, %v869
    %872 = vrot.lane.b32.xlu0 %v866, 96
    %v873 = vpop.permute.xlu0 %872
    %v875 = vadd.f32 %v871, %v873
    %v876 = vld [vmem:[#allocation2 + $0x1f8] sm:$0x1]
    %v877 = vadd.f32 %v875, %v876
    %v878 = vld [vmem:[%s2] sm:$0x1]
    %880 = vrot.lane.b32.xlu0 %v878, 120
    %v881 = vpop.permute.xlu0 %880
    %v883 = vsel %vm166, %v877, %v881
    %v884 = vld [vmem:[#allocation2 + $0x200] sm:$0xff]
    %v885 = vld [vmem:[#allocation2 + $0x208] sm:$0xff]
    %v886 = vld [vmem:[#allocation2 + $0x210] sm:$0xff]
    %v887 = vld [vmem:[#allocation2 + $0x218] sm:$0xff]
    %v888 = vld [vmem:[#allocation2 + $0x240] sm:$0x1]
    %vm889 = vcmask 261120
    %v891 = vsel %vm889, %v883, 0
    %893 = vmatprep.subr.mxu0 0.0
    %894 = vmatpush1.msra.mxu0 0.0
    %895 = vmatprep.subr.mxu0 0.0
    %896 = vmatpush1.msra.mxu0 0.0
    %897 = vmatprep.subr.mxu0 0.0
    %898 = vmatpush1.msra.mxu0 0.0
    %899 = vmatprep.subr.mxu0 0.0
    %900 = vmatpush1.msra.mxu0 0.0
    %901 = vmatprep.subr.mxu0 0.0
    %902 = vmatpush1.msra.mxu0 0.0
    %903 = vmatprep.subr.mxu0 0.0
    %904 = vmatpush1.msra.mxu0 0.0
    %905 = vmatprep.subr.mxu0 0.0
    %906 = vmatpush1.msra.mxu0 0.0
    %907 = vmatprep.subr.mxu0 0.0
    %908 = vmatpush1.msra.mxu0 0.0
    %909 = vmatprep.subr.mxu0 0.0
    %910 = vmatpush1.msra.mxu0 0.0
    %911 = vmatprep.subr.mxu0 0.0
    %912 = vmatpush1.msra.mxu0 0.0
    %913 = vmatprep.subr.mxu0 0.0
    %914 = vmatpush1.msra.mxu0 0.0
    %915 = vmatprep.subr.mxu0 0.0
    %916 = vmatpush1.msra.mxu0 0.0
    %917 = vmatprep.subr.mxu0 0.0
    %918 = vmatpush1.msra.mxu0 %v887
    %919 = vmatprep.subr.mxu0 0.0
    %920 = vmatpush1.msra.mxu0 %v886
    %921 = vmatprep.subr.mxu0 0.0
    %922 = vmatpush1.msra.mxu0 %v885
    %923 = vmatprep.subr.mxu0 0.0
    %924 = vmatpush1.msra.mxu0 %v884
    %925 = vmatprep.subr.mxu0 0.0
    %926 = vmatpush2.msra.mxu0 0.0
    %927 = vmatprep.subr.mxu0 0.0
    %928 = vmatpush2.msra.mxu0 0.0
    %929 = vmatprep.subr.mxu0 0.0
    %930 = vmatpush2.msra.mxu0 0.0
    %931 = vmatprep.subr.mxu0 0.0
    %932 = vmatpush2.msra.mxu0 0.0
    %933 = vmatprep.subr.mxu0 0.0
    %934 = vmatpush2.msra.mxu0 0.0
    %935 = vmatprep.subr.mxu0 0.0
    %936 = vmatpush2.msra.mxu0 0.0
    %937 = vmatprep.subr.mxu0 0.0
    %938 = vmatpush2.msra.mxu0 0.0
    %939 = vmatprep.subr.mxu0 0.0
    %940 = vmatpush2.msra.mxu0 0.0
    %941 = vmatprep.subr.mxu0 0.0
    %942 = vmatpush2.msra.mxu0 0.0
    %943 = vmatprep.subr.mxu0 0.0
    %944 = vmatpush2.msra.mxu0 0.0
    %945 = vmatprep.subr.mxu0 0.0
    %946 = vmatpush2.msra.mxu0 0.0
    %947 = vmatprep.subr.mxu0 0.0
    %948 = vmatpush2.msra.mxu0 0.0
    %949 = vmatprep.subr.mxu0 0.0
    %950 = vmatpush2.msra.mxu0 0.0
    %951 = vmatprep.subr.mxu0 0.0
    %952 = vmatpush2.msra.mxu0 0.0
    %953 = vmatprep.subr.mxu0 0.0
    %954 = vmatpush2.msra.mxu0 0.0
    %955 = vmatprep.subr.mxu0 0.0
    %956 = vmatpush2.msra.mxu0 0.0
    %957 = vmatprep.mubr.f32.mxu0 0.0
    %958 = vmatmul.mubr.f32.gmra.mxu0 %v891
    %v959 = vpop.f32.mrf.mxu0
    %v960 = vadd.f32 %v888, %v959
    %v961 = vpop.f32.mrf.mxu0
    %962 = vdwg.mxu0
    %v963 = vmul.f32 %v960, 0.5
    %v964 = vmul.f32 %v960, 0.70710677
    %v965 = verf.f32.pop %v964
    %v966 = vadd.f32 %v965, 1.0
    %v967 = vmul.f32 %v963, %v966
    %v968 = vld [vmem:[#allocation2 + $0x220] sm:$0xff]
    %v969 = vld [vmem:[#allocation2 + $0x228] sm:$0xff]
    %v970 = vld [vmem:[#allocation2 + $0x230] sm:$0xff]
    %v971 = vld [vmem:[#allocation2 + $0x238] sm:$0xff]
    %v972 = vld [vmem:[#allocation2 + $0x241] sm:$0x1]
    %v974 = vsel %vm889, %v967, 0
    %976 = vmatprep.subr.mxu0 0.0
    %977 = vmatpush1.msra.mxu0 0.0
    %978 = vmatprep.subr.mxu0 0.0
    %979 = vmatpush1.msra.mxu0 0.0
    %980 = vmatprep.subr.mxu0 0.0
    %981 = vmatpush1.msra.mxu0 0.0
    %982 = vmatprep.subr.mxu0 0.0
    %983 = vmatpush1.msra.mxu0 0.0
    %984 = vmatprep.subr.mxu0 0.0
    %985 = vmatpush1.msra.mxu0 0.0
    %986 = vmatprep.subr.mxu0 0.0
    %987 = vmatpush1.msra.mxu0 0.0
    %988 = vmatprep.subr.mxu0 0.0
    %989 = vmatpush1.msra.mxu0 0.0
    %990 = vmatprep.subr.mxu0 0.0
    %991 = vmatpush1.msra.mxu0 0.0
    %992 = vmatprep.subr.mxu0 0.0
    %993 = vmatpush1.msra.mxu0 0.0
    %994 = vmatprep.subr.mxu0 0.0
    %995 = vmatpush1.msra.mxu0 0.0
    %996 = vmatprep.subr.mxu0 0.0
    %997 = vmatpush1.msra.mxu0 0.0
    %998 = vmatprep.subr.mxu0 0.0
    %999 = vmatpush1.msra.mxu0 0.0
    %1000 = vmatprep.subr.mxu0 0.0
    %1001 = vmatpush1.msra.mxu0 %v971
    %1002 = vmatprep.subr.mxu0 0.0
    %1003 = vmatpush1.msra.mxu0 %v970
    %1004 = vmatprep.subr.mxu0 0.0
    %1005 = vmatpush1.msra.mxu0 %v969
    %1006 = vmatprep.subr.mxu0 0.0
    %1007 = vmatpush1.msra.mxu0 %v968
    %1008 = vmatprep.subr.mxu0 0.0
    %1009 = vmatpush2.msra.mxu0 0.0
    %1010 = vmatprep.subr.mxu0 0.0
    %1011 = vmatpush2.msra.mxu0 0.0
    %1012 = vmatprep.subr.mxu0 0.0
    %1013 = vmatpush2.msra.mxu0 0.0
    %1014 = vmatprep.subr.mxu0 0.0
    %1015 = vmatpush2.msra.mxu0 0.0
    %1016 = vmatprep.subr.mxu0 0.0
    %1017 = vmatpush2.msra.mxu0 0.0
    %1018 = vmatprep.subr.mxu0 0.0
    %1019 = vmatpush2.msra.mxu0 0.0
    %1020 = vmatprep.subr.mxu0 0.0
    %1021 = vmatpush2.msra.mxu0 0.0
    %1022 = vmatprep.subr.mxu0 0.0
    %1023 = vmatpush2.msra.mxu0 0.0
    %1024 = vmatprep.subr.mxu0 0.0
    %1025 = vmatpush2.msra.mxu0 0.0
    %1026 = vmatprep.subr.mxu0 0.0
    %1027 = vmatpush2.msra.mxu0 0.0
    %1028 = vmatprep.subr.mxu0 0.0
    %1029 = vmatpush2.msra.mxu0 0.0
    %1030 = vmatprep.subr.mxu0 0.0
    %1031 = vmatpush2.msra.mxu0 0.0
    %1032 = vmatprep.subr.mxu0 0.0
    %1033 = vmatpush2.msra.mxu0 0.0
    %1034 = vmatprep.subr.mxu0 0.0
    %1035 = vmatpush2.msra.mxu0 0.0
    %1036 = vmatprep.subr.mxu0 0.0
    %1037 = vmatpush2.msra.mxu0 0.0
    %1038 = vmatprep.subr.mxu0 0.0
    %1039 = vmatpush2.msra.mxu0 0.0
    %1040 = vmatprep.mubr.f32.mxu0 0.0
    %1041 = vmatmul.mubr.f32.gmra.mxu0 %v974
    %v1042 = vpop.f32.mrf.mxu0
    %v1043 = vadd.f32 %v972, %v1042
    %v1044 = vpop.f32.mrf.mxu0
    %1045 = vdwg.mxu0
    %v1046 = vmul.f32 %v1043, 0.5
    %v1047 = vmul.f32 %v1043, 0.70710677
    %v1048 = verf.f32.pop %v1047
    %v1049 = vadd.f32 %v1048, 1.0
    %v1050 = vmul.f32 %v1046, %v1049
    %v1051 = vld [vmem:[#allocation2 + $0x248] sm:$0xff]
    %v1052 = vld [vmem:[#allocation2 + $0x250] sm:$0xff]
    %v1053 = vld [vmem:[#allocation2 + $0x258] sm:$0x1]
    %v1055 = vsel %vm166, %v1050, 0
    %1057 = vmatprep.subr.mxu0 0.0
    %1058 = vmatpush1.msra.mxu0 0.0
    %1059 = vmatprep.subr.mxu0 0.0
    %1060 = vmatpush1.msra.mxu0 0.0
    %1061 = vmatprep.subr.mxu0 0.0
    %1062 = vmatpush1.msra.mxu0 0.0
    %1063 = vmatprep.subr.mxu0 0.0
    %1064 = vmatpush1.msra.mxu0 0.0
    %1065 = vmatprep.subr.mxu0 0.0
    %1066 = vmatpush1.msra.mxu0 0.0
    %1067 = vmatprep.subr.mxu0 0.0
    %1068 = vmatpush1.msra.mxu0 0.0
    %1069 = vmatprep.subr.mxu0 0.0
    %1070 = vmatpush1.msra.mxu0 0.0
    %1071 = vmatprep.subr.mxu0 0.0
    %1072 = vmatpush1.msra.mxu0 0.0
    %1073 = vmatprep.subr.mxu0 0.0
    %1074 = vmatpush1.msra.mxu0 0.0
    %1075 = vmatprep.subr.mxu0 0.0
    %1076 = vmatpush1.msra.mxu0 0.0
    %1077 = vmatprep.subr.mxu0 0.0
    %1078 = vmatpush1.msra.mxu0 0.0
    %1079 = vmatprep.subr.mxu0 0.0
    %1080 = vmatpush1.msra.mxu0 0.0
    %1081 = vmatprep.subr.mxu0 0.0
    %1082 = vmatpush1.msra.mxu0 0.0
    %1083 = vmatprep.subr.mxu0 0.0
    %1084 = vmatpush1.msra.mxu0 0.0
    %1085 = vmatprep.subr.mxu0 0.0
    %1086 = vmatpush1.msra.mxu0 %v1052
    %1087 = vmatprep.subr.mxu0 0.0
    %1088 = vmatpush1.msra.mxu0 %v1051
    %1089 = vmatprep.subr.mxu0 0.0
    %1090 = vmatpush2.msra.mxu0 0.0
    %1091 = vmatprep.subr.mxu0 0.0
    %1092 = vmatpush2.msra.mxu0 0.0
    %1093 = vmatprep.subr.mxu0 0.0
    %1094 = vmatpush2.msra.mxu0 0.0
    %1095 = vmatprep.subr.mxu0 0.0
    %1096 = vmatpush2.msra.mxu0 0.0
    %1097 = vmatprep.subr.mxu0 0.0
    %1098 = vmatpush2.msra.mxu0 0.0
    %1099 = vmatprep.subr.mxu0 0.0
    %1100 = vmatpush2.msra.mxu0 0.0
    %1101 = vmatprep.subr.mxu0 0.0
    %1102 = vmatpush2.msra.mxu0 0.0
    %1103 = vmatprep.subr.mxu0 0.0
    %1104 = vmatpush2.msra.mxu0 0.0
    %1105 = vmatprep.subr.mxu0 0.0
    %1106 = vmatpush2.msra.mxu0 0.0
    %1107 = vmatprep.subr.mxu0 0.0
    %1108 = vmatpush2.msra.mxu0 0.0
    %1109 = vmatprep.subr.mxu0 0.0
    %1110 = vmatpush2.msra.mxu0 0.0
    %1111 = vmatprep.subr.mxu0 0.0
    %1112 = vmatpush2.msra.mxu0 0.0
    %1113 = vmatprep.subr.mxu0 0.0
    %1114 = vmatpush2.msra.mxu0 0.0
    %1115 = vmatprep.subr.mxu0 0.0
    %1116 = vmatpush2.msra.mxu0 0.0
    %1117 = vmatprep.subr.mxu0 0.0
    %1118 = vmatpush2.msra.mxu0 0.0
    %1119 = vmatprep.subr.mxu0 0.0
    %1120 = vmatpush2.msra.mxu0 0.0
    %1121 = vmatprep.mubr.f32.mxu0 0.0
    %1122 = vmatmul.mubr.f32.gmra.mxu0 %v1055
    %v1123 = vpop.f32.mrf.mxu0
    %v1124 = vadd.f32 %v1053, %v1123
    %v1125 = vpop.f32.mrf.mxu0
    %1126 = vdwg.mxu0
    %v1127 = vmul.f32 %v1124, 2.5
    %vm1128 = vcmask 49152
    %v1129 = vsel %vm1128, %v1127, -inf
    %1130 = vmax.xlane.f32.xlu0 %v1129
    %v1131 = vpop.xlane.xlu0 %1130
    %v1132 = vsub.f32 %v1127, %v1131
    %v1133 = vmul.f32 %v1132, 1.442695
    %v1134 = vpow.pop %v1133
    %v1135 = vsel %vm1128, %v1134, 0.0
    %1136 = vadd.xlane.f32.xlu0 %v1135
    %v1137 = vpop.xlane.xlu0 %1136
    %v1138 = vrcp.pop %v1137
    %v1139 = vmul.f32 %v1134, %v1138
    %1140 = vrot.lane.b32.xlu0 %v878, 64
    %v1141 = vpop.permute.xlu0 %1140
    %v1143 = vadd.f32 %v1127, %v1141
    %v1144 = vlaneseq
    %v1145 = vand.u32 %v1144, 127
    %v1146 = vcvt.s32.f32 %v1145
    %v1147 = vsel %vm1128, %v1143, -inf
    %1148 = vmax.xlane.f32.xlu0 %v1147
    %v1149 = vpop.xlane.xlu0 %1148
    %vm1150 = vcmp.ge.f32.partialorder %v1143, %v1149
    %v1151 = vsel %vm1150, %v1146, 1e+09
    %v1152 = vsel %vm1128, %v1151, inf
    %1153 = vmin.xlane.f32.xlu0 %v1152
    %v1154 = vpop.xlane.xlu0 %1153
    %vm1155 = vcmp.eq.f32.partialorder %v1146, %v1154
    %v1156 = vsel %vm1155, 1, 0
    %v1157 = vcvt.s32.f32 %v1156
    %v1158 = vld [vmem:[#allocation2 + $0x2c8] sm:$0x7f]
    %vm1159 = vcmask 56320
    %v1161 = vsel %vm1159, %v1157, 0
    %vm1163 = vcmask 1046528
    %v1165 = vsel %vm1163, %v1158, 0
    %1167 = vmatprep.subr.mxu0 0.0
    %1168 = vmatpush1.msra.mxu0 0.0
    %1169 = vmatprep.subr.mxu0 0.0
    %1170 = vmatpush1.msra.mxu0 0.0
    %1171 = vmatprep.subr.mxu0 0.0
    %1172 = vmatpush1.msra.mxu0 0.0
    %1173 = vmatprep.subr.mxu0 0.0
    %1174 = vmatpush1.msra.mxu0 0.0
    %1175 = vmatprep.subr.mxu0 0.0
    %1176 = vmatpush1.msra.mxu0 0.0
    %1177 = vmatprep.subr.mxu0 0.0
    %1178 = vmatpush1.msra.mxu0 0.0
    %1179 = vmatprep.subr.mxu0 0.0
    %1180 = vmatpush1.msra.mxu0 0.0
    %1181 = vmatprep.subr.mxu0 0.0
    %1182 = vmatpush1.msra.mxu0 0.0
    %1183 = vmatprep.subr.mxu0 0.0
    %1184 = vmatpush1.msra.mxu0 0.0
    %1185 = vmatprep.subr.mxu0 0.0
    %1186 = vmatpush1.msra.mxu0 0.0
    %1187 = vmatprep.subr.mxu0 0.0
    %1188 = vmatpush1.msra.mxu0 0.0
    %1189 = vmatprep.subr.mxu0 0.0
    %1190 = vmatpush1.msra.mxu0 0.0
    %1191 = vmatprep.subr.mxu0 0.0
    %1192 = vmatpush1.msra.mxu0 0.0
    %1193 = vmatprep.subr.mxu0 0.0
    %1194 = vmatpush1.msra.mxu0 0.0
    %1195 = vmatprep.subr.mxu0 0.0
    %1196 = vmatpush1.msra.mxu0 0.0
    %1197 = vmatprep.subr.mxu0 0.0
    %1198 = vmatpush1.msra.mxu0 %v1165
    %1199 = vmatprep.subr.mxu0 0.0
    %1200 = vmatpush2.msra.mxu0 0.0
    %1201 = vmatprep.subr.mxu0 0.0
    %1202 = vmatpush2.msra.mxu0 0.0
    %1203 = vmatprep.subr.mxu0 0.0
    %1204 = vmatpush2.msra.mxu0 0.0
    %1205 = vmatprep.subr.mxu0 0.0
    %1206 = vmatpush2.msra.mxu0 0.0
    %1207 = vmatprep.subr.mxu0 0.0
    %1208 = vmatpush2.msra.mxu0 0.0
    %1209 = vmatprep.subr.mxu0 0.0
    %1210 = vmatpush2.msra.mxu0 0.0
    %1211 = vmatprep.subr.mxu0 0.0
    %1212 = vmatpush2.msra.mxu0 0.0
    %1213 = vmatprep.subr.mxu0 0.0
    %1214 = vmatpush2.msra.mxu0 0.0
    %1215 = vmatprep.subr.mxu0 0.0
    %1216 = vmatpush2.msra.mxu0 0.0
    %1217 = vmatprep.subr.mxu0 0.0
    %1218 = vmatpush2.msra.mxu0 0.0
    %1219 = vmatprep.subr.mxu0 0.0
    %1220 = vmatpush2.msra.mxu0 0.0
    %1221 = vmatprep.subr.mxu0 0.0
    %1222 = vmatpush2.msra.mxu0 0.0
    %1223 = vmatprep.subr.mxu0 0.0
    %1224 = vmatpush2.msra.mxu0 0.0
    %1225 = vmatprep.subr.mxu0 0.0
    %1226 = vmatpush2.msra.mxu0 0.0
    %1227 = vmatprep.subr.mxu0 0.0
    %1228 = vmatpush2.msra.mxu0 0.0
    %1229 = vmatprep.subr.mxu0 0.0
    %1230 = vmatpush2.msra.mxu0 0.0
    %1231 = vmatprep.mubr.f32.mxu0 0.0
    %1232 = vmatmul.mubr.f32.gmra.mxu0 %v1161
    %v1233 = vpop.f32.mrf.mxu0
    %v1234 = vadd.f32 0.0, %v1233
    %v1235 = vpop.f32.mrf.mxu0
    %1236 = vdwg.mxu0
    %v1237 = vadd.f32 %v877, %v1234
    %1238 = vrot.lane.b32.xlu0 %v878, 104
    %v1239 = vpop.permute.xlu0 %1238
    %v1241 = vsel %vm166, %v1237, %v1239
    %v1242 = vld [vmem:[#allocation2 + $0x260] sm:$0xff]
    %v1243 = vld [vmem:[#allocation2 + $0x268] sm:$0xff]
    %v1244 = vld [vmem:[#allocation2 + $0x270] sm:$0xff]
    %v1245 = vld [vmem:[#allocation2 + $0x278] sm:$0xff]
    %v1246 = vld [vmem:[#allocation2 + $0x2c0] sm:$0x1]
    %v1248 = vsel %vm889, %v1241, 0
    %1250 = vmatprep.subr.mxu0 0.0
    %1251 = vmatpush1.msra.mxu0 0.0
    %1252 = vmatprep.subr.mxu0 0.0
    %1253 = vmatpush1.msra.mxu0 0.0
    %1254 = vmatprep.subr.mxu0 0.0
    %1255 = vmatpush1.msra.mxu0 0.0
    %1256 = vmatprep.subr.mxu0 0.0
    %1257 = vmatpush1.msra.mxu0 0.0
    %1258 = vmatprep.subr.mxu0 0.0
    %1259 = vmatpush1.msra.mxu0 0.0
    %1260 = vmatprep.subr.mxu0 0.0
    %1261 = vmatpush1.msra.mxu0 0.0
    %1262 = vmatprep.subr.mxu0 0.0
    %1263 = vmatpush1.msra.mxu0 0.0
    %1264 = vmatprep.subr.mxu0 0.0
    %1265 = vmatpush1.msra.mxu0 0.0
    %1266 = vmatprep.subr.mxu0 0.0
    %1267 = vmatpush1.msra.mxu0 0.0
    %1268 = vmatprep.subr.mxu0 0.0
    %1269 = vmatpush1.msra.mxu0 0.0
    %1270 = vmatprep.subr.mxu0 0.0
    %1271 = vmatpush1.msra.mxu0 0.0
    %1272 = vmatprep.subr.mxu0 0.0
    %1273 = vmatpush1.msra.mxu0 0.0
    %1274 = vmatprep.subr.mxu0 0.0
    %1275 = vmatpush1.msra.mxu0 %v1245
    %1276 = vmatprep.subr.mxu0 0.0
    %1277 = vmatpush1.msra.mxu0 %v1244
    %1278 = vmatprep.subr.mxu0 0.0
    %1279 = vmatpush1.msra.mxu0 %v1243
    %1280 = vmatprep.subr.mxu0 0.0
    %1281 = vmatpush1.msra.mxu0 %v1242
    %1282 = vmatprep.subr.mxu0 0.0
    %1283 = vmatpush2.msra.mxu0 0.0
    %1284 = vmatprep.subr.mxu0 0.0
    %1285 = vmatpush2.msra.mxu0 0.0
    %1286 = vmatprep.subr.mxu0 0.0
    %1287 = vmatpush2.msra.mxu0 0.0
    %1288 = vmatprep.subr.mxu0 0.0
    %1289 = vmatpush2.msra.mxu0 0.0
    %1290 = vmatprep.subr.mxu0 0.0
    %1291 = vmatpush2.msra.mxu0 0.0
    %1292 = vmatprep.subr.mxu0 0.0
    %1293 = vmatpush2.msra.mxu0 0.0
    %1294 = vmatprep.subr.mxu0 0.0
    %1295 = vmatpush2.msra.mxu0 0.0
    %1296 = vmatprep.subr.mxu0 0.0
    %1297 = vmatpush2.msra.mxu0 0.0
    %1298 = vmatprep.subr.mxu0 0.0
    %1299 = vmatpush2.msra.mxu0 0.0
    %1300 = vmatprep.subr.mxu0 0.0
    %1301 = vmatpush2.msra.mxu0 0.0
    %1302 = vmatprep.subr.mxu0 0.0
    %1303 = vmatpush2.msra.mxu0 0.0
    %1304 = vmatprep.subr.mxu0 0.0
    %1305 = vmatpush2.msra.mxu0 0.0
    %1306 = vmatprep.subr.mxu0 0.0
    %1307 = vmatpush2.msra.mxu0 0.0
    %1308 = vmatprep.subr.mxu0 0.0
    %1309 = vmatpush2.msra.mxu0 0.0
    %1310 = vmatprep.subr.mxu0 0.0
    %1311 = vmatpush2.msra.mxu0 0.0
    %1312 = vmatprep.subr.mxu0 0.0
    %1313 = vmatpush2.msra.mxu0 0.0
    %1314 = vmatprep.mubr.f32.mxu0 0.0
    %1315 = vmatmul.mubr.f32.gmra.mxu0 %v1248
    %v1316 = vpop.f32.mrf.mxu0
    %v1317 = vadd.f32 %v1246, %v1316
    %v1318 = vpop.f32.mrf.mxu0
    %1319 = vdwg.mxu0
    %v1320 = vmul.f32 %v1317, 0.5
    %v1321 = vmul.f32 %v1317, 0.70710677
    %v1322 = verf.f32.pop %v1321
    %v1323 = vadd.f32 %v1322, 1.0
    %v1324 = vmul.f32 %v1320, %v1323
    %v1325 = vld [vmem:[#allocation2 + $0x280] sm:$0xff]
    %v1326 = vld [vmem:[#allocation2 + $0x288] sm:$0xff]
    %v1327 = vld [vmem:[#allocation2 + $0x290] sm:$0xff]
    %v1328 = vld [vmem:[#allocation2 + $0x298] sm:$0xff]
    %v1329 = vld [vmem:[#allocation2 + $0x2c1] sm:$0x1]
    %v1331 = vsel %vm889, %v1324, 0
    %1333 = vmatprep.subr.mxu0 0.0
    %1334 = vmatpush1.msra.mxu0 0.0
    %1335 = vmatprep.subr.mxu0 0.0
    %1336 = vmatpush1.msra.mxu0 0.0
    %1337 = vmatprep.subr.mxu0 0.0
    %1338 = vmatpush1.msra.mxu0 0.0
    %1339 = vmatprep.subr.mxu0 0.0
    %1340 = vmatpush1.msra.mxu0 0.0
    %1341 = vmatprep.subr.mxu0 0.0
    %1342 = vmatpush1.msra.mxu0 0.0
    %1343 = vmatprep.subr.mxu0 0.0
    %1344 = vmatpush1.msra.mxu0 0.0
    %1345 = vmatprep.subr.mxu0 0.0
    %1346 = vmatpush1.msra.mxu0 0.0
    %1347 = vmatprep.subr.mxu0 0.0
    %1348 = vmatpush1.msra.mxu0 0.0
    %1349 = vmatprep.subr.mxu0 0.0
    %1350 = vmatpush1.msra.mxu0 0.0
    %1351 = vmatprep.subr.mxu0 0.0
    %1352 = vmatpush1.msra.mxu0 0.0
    %1353 = vmatprep.subr.mxu0 0.0
    %1354 = vmatpush1.msra.mxu0 0.0
    %1355 = vmatprep.subr.mxu0 0.0
    %1356 = vmatpush1.msra.mxu0 0.0
    %1357 = vmatprep.subr.mxu0 0.0
    %1358 = vmatpush1.msra.mxu0 %v1328
    %1359 = vmatprep.subr.mxu0 0.0
    %1360 = vmatpush1.msra.mxu0 %v1327
    %1361 = vmatprep.subr.mxu0 0.0
    %1362 = vmatpush1.msra.mxu0 %v1326
    %1363 = vmatprep.subr.mxu0 0.0
    %1364 = vmatpush1.msra.mxu0 %v1325
    %1365 = vmatprep.subr.mxu0 0.0
    %1366 = vmatpush2.msra.mxu0 0.0
    %1367 = vmatprep.subr.mxu0 0.0
    %1368 = vmatpush2.msra.mxu0 0.0
    %1369 = vmatprep.subr.mxu0 0.0
    %1370 = vmatpush2.msra.mxu0 0.0
    %1371 = vmatprep.subr.mxu0 0.0
    %1372 = vmatpush2.msra.mxu0 0.0
    %1373 = vmatprep.subr.mxu0 0.0
    %1374 = vmatpush2.msra.mxu0 0.0
    %1375 = vmatprep.subr.mxu0 0.0
    %1376 = vmatpush2.msra.mxu0 0.0
    %1377 = vmatprep.subr.mxu0 0.0
    %1378 = vmatpush2.msra.mxu0 0.0
    %1379 = vmatprep.subr.mxu0 0.0
    %1380 = vmatpush2.msra.mxu0 0.0
    %1381 = vmatprep.subr.mxu0 0.0
    %1382 = vmatpush2.msra.mxu0 0.0
    %1383 = vmatprep.subr.mxu0 0.0
    %1384 = vmatpush2.msra.mxu0 0.0
    %1385 = vmatprep.subr.mxu0 0.0
    %1386 = vmatpush2.msra.mxu0 0.0
    %1387 = vmatprep.subr.mxu0 0.0
    %1388 = vmatpush2.msra.mxu0 0.0
    %1389 = vmatprep.subr.mxu0 0.0
    %1390 = vmatpush2.msra.mxu0 0.0
    %1391 = vmatprep.subr.mxu0 0.0
    %1392 = vmatpush2.msra.mxu0 0.0
    %1393 = vmatprep.subr.mxu0 0.0
    %1394 = vmatpush2.msra.mxu0 0.0
    %1395 = vmatprep.subr.mxu0 0.0
    %1396 = vmatpush2.msra.mxu0 0.0
    %1397 = vmatprep.mubr.f32.mxu0 0.0
    %1398 = vmatmul.mubr.f32.gmra.mxu0 %v1331
    %v1399 = vpop.f32.mrf.mxu0
    %v1400 = vadd.f32 %v1329, %v1399
    %v1401 = vpop.f32.mrf.mxu0
    %1402 = vdwg.mxu0
    %v1403 = vmul.f32 %v1400, 0.5
    %v1404 = vmul.f32 %v1400, 0.70710677
    %v1405 = verf.f32.pop %v1404
    %v1406 = vadd.f32 %v1405, 1.0
    %v1407 = vmul.f32 %v1403, %v1406
    %v1408 = vld [vmem:[#allocation2 + $0x2a0] sm:$0xff]
    %v1409 = vld [vmem:[#allocation2 + $0x2a8] sm:$0xff]
    %v1410 = vld [vmem:[#allocation2 + $0x2b0] sm:$0xff]
    %v1411 = vld [vmem:[#allocation2 + $0x2b8] sm:$0xff]
    %v1412 = vld [vmem:[#allocation2 + $0x2c2] sm:$0x1]
    %v1414 = vsel %vm889, %v1407, 0
    %1416 = vmatprep.subr.mxu0 0.0
    %1417 = vmatpush1.msra.mxu0 0.0
    %1418 = vmatprep.subr.mxu0 0.0
    %1419 = vmatpush1.msra.mxu0 0.0
    %1420 = vmatprep.subr.mxu0 0.0
    %1421 = vmatpush1.msra.mxu0 0.0
    %1422 = vmatprep.subr.mxu0 0.0
    %1423 = vmatpush1.msra.mxu0 0.0
    %1424 = vmatprep.subr.mxu0 0.0
    %1425 = vmatpush1.msra.mxu0 0.0
    %1426 = vmatprep.subr.mxu0 0.0
    %1427 = vmatpush1.msra.mxu0 0.0
    %1428 = vmatprep.subr.mxu0 0.0
    %1429 = vmatpush1.msra.mxu0 0.0
    %1430 = vmatprep.subr.mxu0 0.0
    %1431 = vmatpush1.msra.mxu0 0.0
    %1432 = vmatprep.subr.mxu0 0.0
    %1433 = vmatpush1.msra.mxu0 0.0
    %1434 = vmatprep.subr.mxu0 0.0
    %1435 = vmatpush1.msra.mxu0 0.0
    %1436 = vmatprep.subr.mxu0 0.0
    %1437 = vmatpush1.msra.mxu0 0.0
    %1438 = vmatprep.subr.mxu0 0.0
    %1439 = vmatpush1.msra.mxu0 0.0
    %1440 = vmatprep.subr.mxu0 0.0
    %1441 = vmatpush1.msra.mxu0 %v1411
    %1442 = vmatprep.subr.mxu0 0.0
    %1443 = vmatpush1.msra.mxu0 %v1410
    %1444 = vmatprep.subr.mxu0 0.0
    %1445 = vmatpush1.msra.mxu0 %v1409
    %1446 = vmatprep.subr.mxu0 0.0
    %1447 = vmatpush1.msra.mxu0 %v1408
    %1448 = vmatprep.subr.mxu0 0.0
    %1449 = vmatpush2.msra.mxu0 0.0
    %1450 = vmatprep.subr.mxu0 0.0
    %1451 = vmatpush2.msra.mxu0 0.0
    %1452 = vmatprep.subr.mxu0 0.0
    %1453 = vmatpush2.msra.mxu0 0.0
    %1454 = vmatprep.subr.mxu0 0.0
    %1455 = vmatpush2.msra.mxu0 0.0
    %1456 = vmatprep.subr.mxu0 0.0
    %1457 = vmatpush2.msra.mxu0 0.0
    %1458 = vmatprep.subr.mxu0 0.0
    %1459 = vmatpush2.msra.mxu0 0.0
    %1460 = vmatprep.subr.mxu0 0.0
    %1461 = vmatpush2.msra.mxu0 0.0
    %1462 = vmatprep.subr.mxu0 0.0
    %1463 = vmatpush2.msra.mxu0 0.0
    %1464 = vmatprep.subr.mxu0 0.0
    %1465 = vmatpush2.msra.mxu0 0.0
    %1466 = vmatprep.subr.mxu0 0.0
    %1467 = vmatpush2.msra.mxu0 0.0
    %1468 = vmatprep.subr.mxu0 0.0
    %1469 = vmatpush2.msra.mxu0 0.0
    %1470 = vmatprep.subr.mxu0 0.0
    %1471 = vmatpush2.msra.mxu0 0.0
    %1472 = vmatprep.subr.mxu0 0.0
    %1473 = vmatpush2.msra.mxu0 0.0
    %1474 = vmatprep.subr.mxu0 0.0
    %1475 = vmatpush2.msra.mxu0 0.0
    %1476 = vmatprep.subr.mxu0 0.0
    %1477 = vmatpush2.msra.mxu0 0.0
    %1478 = vmatprep.subr.mxu0 0.0
    %1479 = vmatpush2.msra.mxu0 0.0
    %1480 = vmatprep.mubr.f32.mxu0 0.0
    %1481 = vmatmul.mubr.f32.gmra.mxu0 %v1414
    %v1482 = vpop.f32.mrf.mxu0
    %v1483 = vadd.f32 %v1412, %v1482
    %v1484 = vpop.f32.mrf.mxu0
    %1485 = vdwg.mxu0
    %v1486 = vmul.f32 %v1483, 0.5
    %v1487 = vmul.f32 %v1483, 0.70710677
    %v1488 = verf.f32.pop %v1487
    %v1489 = vadd.f32 %v1488, 1.0
    %v1490 = vmul.f32 %v1486, %v1489
    %1492 = vrot.lane.b32.xlu0 %v1490, 8
    %v1493 = vpop.permute.xlu0 %1492
    %1495 = vrot.lane.b32.xlu0 %v1050, 8
    %v1496 = vpop.permute.xlu0 %1495
    %1498 = vrot.lane.b32.xlu0 %v1490, 24
    %v1499 = vpop.permute.xlu0 %1498
    %v1501 = vsel %vm1159, %v1139, 0.0
    %v1502 = vsel %vm514, %v1501, %v1493
    %vm1503 = vcmask 195584
    %v1504 = vsel %vm1503, %v1502, %v1496
    %vm1505 = vcmask 326656
    %v1506 = vsel %vm1505, %v1504, %v1499
    %v1507 = vsel %vm618, %v1506, %v1154
    %vm1508 = vcmask 465920
    %v1509 = vsel %vm1508, %v1507, 0.0
    %vm1510 = vcmask 1040384
    %v1511 = vsel %vm1510, %v1509, 0.0
    %1512 = vst [vmem:[%s3] sm:$0xff] %v1511
    // Predicated region
    $region18: #{forward.1} parent=1 // pred_check
      _
    $region19: #{forward.1} parent=1 // pred_check_branch
      %1514 = sbr.rel (0) target = $region21
    $region20: #{forward.1} parent=1 // pred_region
      _
    $region21: #{forward.1} parent=1 // pred_fallthru
      _
    // Predicated region
    $region22: #{forward.1} parent=1 // pred_check
      _
    $region23: #{forward.1} parent=1 // pred_check_branch
      %1516 = sbr.rel (0) target = $region25
    $region24: #{forward.1} parent=1 // pred_region
      _
    $region25: #{forward.1} parent=1 // pred_fallthru
      _
    %1517 = vsyncpa [#allocation3], 1

</llo_original>
